<compile_context>
chip_gen: v7x
topology: tpu7x:2x2x1
jax: 0.10.0
libtpu: 0.0.40
codegen_flags: <defaults>
</compile_context>

<pallas_src>
import functools

import jax
import jax.numpy as jnp
from jax.experimental import pallas as pl
from jax.experimental.pallas import tpu as pltpu


def _phase_shuffle_kernel(k_ref, x_ref, o_ref, *, shift_factor, length, b_blk):
    """One grid step == one block of `b_blk` batch elements.

    k_ref : (B,) int32 in SMEM (scalar prefetch) -- per-batch shift in [-n, n]
    x_ref : (b_blk, C, L) input tile  (L on lanes, C on sublanes)
    o_ref : (b_blk, C, L) output tile
    """
    g = pl.program_id(0)
    c = x_ref.shape[1]
    # Lane-index pattern shared by every reflect fix-up select; tiny and
    # trivially re-materializable, so keeping it live across branches is free.
    lane = jax.lax.broadcasted_iota(jnp.int32, (c, length), 1)

    for i in range(b_blk):                        # static unroll, b_blk small
        k = k_ref[g * b_blk + i]

        # ---- k == 0 : identity ------------------------------------------------
        @pl.when(k == 0)
        def _(i=i):
            o_ref[i] = x_ref[i]

        # ---- k == +s : shift right by s, reflect-pad on the left ---------------
        #   y[:, j] = x[:, s - j]  for j <  s   (reflection, edge excluded)
        #   y[:, j] = x[:, j - s]  for j >= s
        def emit_pos(s, i=i, k=k):
            @pl.when(k == s)
            def _():
                x = x_ref[i]                               # (C, L) load in-branch
                res = pltpu.roll(x, shift=s, axis=1)       # XLU lane rotate
                for j in range(s):                         # s <= shift_factor
                    res = jnp.where(lane == j, x[:, s - j:s - j + 1], res)
                o_ref[i] = res                             # one aligned store

        # ---- k == -s : shift left by s, reflect-pad on the right ---------------
        #   y[:, j]         = x[:, j + s]      for j < L - s
        #   y[:, L - s + t] = x[:, L - 2 - t]  for t in [0, s)
        def emit_neg(s, i=i, k=k):
            @pl.when(k == -s)
            def _():
                x = x_ref[i]
                # roll by (L - s) == left-rotate by s; keeps the rotate amount
                # non-negative for the Mosaic lowering.
                res = pltpu.roll(x, shift=length - s, axis=1)
                for t in range(s):
                    res = jnp.where(lane == length - s + t,
                                    x[:, length - 2 - t:length - 1 - t], res)
                o_ref[i] = res

        for s in range(1, shift_factor + 1):      # 2n static branches per batch
            emit_pos(s)
            emit_neg(s)


def _pick_b_block(batch, per_batch_bytes, *, target_bytes=1 << 20,
                  vmem_budget=12 << 20):
    """Largest divisor of `batch` giving ~MiB-scale DMAs, a >= 2-step grid
    (so the "parallel" batch axis can split across v7x's two TensorCores) and
    a double-buffered in+out footprint under the default scoped-VMEM limit."""
    if batch <= 1:
        return 1
    cap = min(batch // 2,
              max(1, target_bytes // per_batch_bytes),
              max(1, vmem_budget // (4 * per_batch_bytes)))
    cap = max(1, min(cap, batch))
    for d in range(int(cap), 0, -1):
        if batch % d == 0:
            return d
    return 1


def phase_shuffle(x, shift_factor, *, key=None, k_list=None, b_block=None):
    """PhaseShuffle forward.  x: (B, C, L) -> (B, C, L).

    Per-batch shifts are drawn uniformly from {-n, ..., n} with jax.random
    (stand-in for torch.Tensor.random_) unless an explicit int32 `k_list`
    of shape (B,) is supplied.
    """
    if shift_factor == 0:
        return x
    B, C, L = x.shape
    if L < shift_factor + 1:
        raise ValueError(f"reflect padding needs L > shift_factor "
                         f"(got L={L}, shift_factor={shift_factor})")
    if k_list is None:
        if key is None:
            raise ValueError("phase_shuffle needs `key` or an explicit `k_list`")
        k_list = jax.random.randint(key, (B,), -shift_factor, shift_factor + 1)
    # Clamp so every shift hits a pl.when branch; an out-of-range k would
    # otherwise leave its output block unwritten (stale VMEM).
    k_list = jnp.clip(jnp.asarray(k_list, jnp.int32), -shift_factor, shift_factor)

    itemsize = jnp.dtype(x.dtype).itemsize
    per_batch_bytes = C * L * itemsize
    if b_block is None:
        b_block = _pick_b_block(B, per_batch_bytes)
    if B % b_block != 0:
        raise ValueError(f"b_block={b_block} must divide B={B}")
    grid = (B // b_block,)

    # in + out, double-buffered by the BlockSpec pipeline, plus slack.
    vmem_needed = 4 * b_block * per_batch_bytes + (1 << 20)
    compiler_kwargs = dict(dimension_semantics=("parallel",))
    if vmem_needed > (16 << 20):
        # TODO(synk): for very long L (raw audio) on v7x's 64 MiB VMEM, tile L
        # in the grid with a shift_factor-wide halo instead of only raising
        # the scoped-VMEM limit.
        compiler_kwargs["vmem_limit_bytes"] = int(min(vmem_needed, 60 << 20))

    kern = functools.partial(_phase_shuffle_kernel, shift_factor=shift_factor,
                             length=L, b_blk=b_block)

    # NOTE: for sub-32-bit dtypes with C below the packing height (16 rows
    # bf16 / 32 rows int8) the (C, L) vregs are only partially filled; fold
    # batch into the sublane dim if that ever becomes the bottleneck.
    return pl.pallas_call(
        kern,
        out_shape=jax.ShapeDtypeStruct((B, C, L), x.dtype),
        grid_spec=pltpu.PrefetchScalarGridSpec(
            num_scalar_prefetch=1,                        # k_list -> SMEM
            grid=grid,
            in_specs=[pl.BlockSpec((b_block, C, L), lambda g, ks: (g, 0, 0))],
            out_specs=pl.BlockSpec((b_block, C, L), lambda g, ks: (g, 0, 0)),
        ),
        compiler_params=pltpu.CompilerParams(**compiler_kwargs),
        cost_estimate=pl.CostEstimate(flops=0, transcendentals=0,
                                      bytes_accessed=2 * B * C * L * itemsize),
    )(k_list, x)


def phase_shuffle_reference(x, k_list):
    """Pure-JAX mirror of the PyTorch module (explicit shifts)."""
    outs = []
    for b in range(x.shape[0]):
        k = int(k_list[b])
        xb = x[b]
        if k > 0:
            out = jnp.pad(xb[:, :-k], ((0, 0), (k, 0)), mode="reflect")
        elif k < 0:
            out = jnp.pad(xb[:, -k:], ((0, 0), (0, -k)), mode="reflect")
        else:
            out = xb
        outs.append(out)
    return jnp.stack(outs)


if __name__ == "__main__":
    # Small config: WaveGAN-style discriminator typically uses shift_factor=2.
    B, C, L, n = 8, 8, 256, 2

    key = jax.random.PRNGKey(0)
    kx, kk = jax.random.split(key)
    x = jax.random.normal(kx, (B, C, L), jnp.float32)

    # 1) deterministic shifts covering every branch {-2, -1, 0, +1, +2}
    k_fixed = jnp.array([-2, -1, 0, 1, 2, 2, -1, 0], jnp.int32)
    out = jax.block_until_ready(phase_shuffle(x, n, k_list=k_fixed))
    ref = phase_shuffle_reference(x, k_fixed)
    assert out.shape == ref.shape, (out.shape, ref.shape)
    assert jnp.array_equal(out, ref), float(jnp.max(jnp.abs(out - ref)))

    # 2) module-style call: shifts drawn inside the wrapper from a PRNG key.
    # TODO(synk): torch.Tensor.random_'s RNG stream cannot be reproduced
    # bit-exactly; jax.random draws the same uniform {-n..n} distribution.
    out2 = jax.block_until_ready(phase_shuffle(x, n, key=kk))
    k_rand = jax.random.randint(kk, (B,), -n, n + 1)
    ref2 = phase_shuffle_reference(x, k_rand)
    assert jnp.array_equal(out2, ref2), float(jnp.max(jnp.abs(out2 - ref2)))

    # 3) shift_factor == 0 short-circuits to identity (matches the module)
    assert jnp.array_equal(phase_shuffle(x, 0, k_list=k_fixed), x)

    print("KERNEL_OK")
</pallas_src>

<mosaic_0001>
module attributes {stable_mosaic.version = 11 : i64} {
  func.func @_phase_shuffle_kernel(%arg0: i32, %arg1: memref<8xi32, #tpu.memory_space<smem>>, %arg2: memref<4x8x256xf32, #tpu.memory_space<vmem>>, %arg3: memref<4x8x256xf32, #tpu.memory_space<vmem>>) attributes {dimension_semantics = [#tpu.dimension_semantics<parallel>], iteration_bounds = array<i64: 2>, scalar_prefetch = 1 : i64, scratch_operands = 0 : i64, tpu.core_type = #tpu.core_type<tc>, window_params = [{transform_indices = @transform_0, window_bounds = array<i64: 4, 8, 256>}, {transform_indices = @transform_1, window_bounds = array<i64: 4, 8, 256>}]} {
    %0 = tpu.iota {dimensions = array<i32: 1>} : vector<8x256xi32>
    %c4_i32 = arith.constant 4 : i32
    %1 = arith.muli %arg0, %c4_i32 : i32
    %c0_i32 = arith.constant 0 : i32
    %2 = arith.addi %1, %c0_i32 : i32
    %3 = arith.index_cast %2 : i32 to index
    %4 = memref.load %arg1[%3] : memref<8xi32, #tpu.memory_space<smem>>
    %c0_i32_0 = arith.constant 0 : i32
    %5 = arith.cmpi eq, %4, %c0_i32_0 : i32
    %6 = arith.extui %5 : i1 to i32
    %c0_i32_1 = arith.constant 0 : i32
    %7 = arith.cmpi ne, %6, %c0_i32_1 : i32
    scf.if %7 {
      %c0 = arith.constant 0 : index
      %c0_41 = arith.constant 0 : index
      %c0_42 = arith.constant 0 : index
      %77 = vector.load %arg2[%c0, %c0_41, %c0_42] : memref<4x8x256xf32, #tpu.memory_space<vmem>>, vector<1x8x256xf32>
      %78 = vector.shape_cast %77 : vector<1x8x256xf32> to vector<8x256xf32>
      %c0_43 = arith.constant 0 : index
      %c0_44 = arith.constant 0 : index
      %c0_45 = arith.constant 0 : index
      %79 = vector.load %arg3[%c0_43, %c0_44, %c0_45] : memref<4x8x256xf32, #tpu.memory_space<vmem>>, vector<1x8x256xf32>
      %80 = vector.shape_cast %79 : vector<1x8x256xf32> to vector<8x256xf32>
      %81 = vector.shape_cast %78 : vector<8x256xf32> to vector<1x8x256xf32>
      tpu.vector_store %arg3[%c0_43, %c0_44, %c0_45], %81 {strides = array<i32>} : memref<4x8x256xf32, #tpu.memory_space<vmem>>, vector<1x8x256xf32>,
    } else {
    }
    %c1_i32 = arith.constant 1 : i32
    %8 = arith.cmpi eq, %4, %c1_i32 : i32
    %9 = arith.extui %8 : i1 to i32
    %c0_i32_2 = arith.constant 0 : i32
    %10 = arith.cmpi ne, %9, %c0_i32_2 : i32
    scf.if %10 {
      %c0 = arith.constant 0 : index
      %c0_41 = arith.constant 0 : index
      %c0_42 = arith.constant 0 : index
      %77 = vector.load %arg2[%c0, %c0_41, %c0_42] : memref<4x8x256xf32, #tpu.memory_space<vmem>>, vector<1x8x256xf32>
      %78 = vector.shape_cast %77 : vector<1x8x256xf32> to vector<8x256xf32>
      %c1_i32_43 = arith.constant 1 : i32
      %79 = tpu.dynamic_rotate %78 by %c1_i32_43 dim 1 : vector<8x256xf32>, i32 -> vector<8x256xf32>
      %c0_i32_44 = arith.constant 0 : i32
      %80 = vector.broadcast %c0_i32_44 : i32 to vector<8x256xi32>
      %81 = arith.cmpi eq, %0, %80 : vector<8x256xi32>
      %82 = vector.extract_strided_slice %78 {offsets = [0, 1], sizes = [8, 1], strides = [1, 1]} : vector<8x256xf32> to vector<8x1xf32>
      %83 = vector.shape_cast %82 : vector<8x1xf32> to vector<8x1xf32>
      %84 = vector.broadcast %83 : vector<8x1xf32> to vector<8x256xf32>
      %85 = arith.select %81, %84, %79 : vector<8x256xi1>, vector<8x256xf32>
      %c0_45 = arith.constant 0 : index
      %c0_46 = arith.constant 0 : index
      %c0_47 = arith.constant 0 : index
      %86 = vector.load %arg3[%c0_45, %c0_46, %c0_47] : memref<4x8x256xf32, #tpu.memory_space<vmem>>, vector<1x8x256xf32>
      %87 = vector.shape_cast %86 : vector<1x8x256xf32> to vector<8x256xf32>
      %88 = vector.shape_cast %85 : vector<8x256xf32> to vector<1x8x256xf32>
      tpu.vector_store %arg3[%c0_45, %c0_46, %c0_47], %88 {strides = array<i32>} : memref<4x8x256xf32, #tpu.memory_space<vmem>>, vector<1x8x256xf32>,
    } else {
    }
    %c-1_i32 = arith.constant -1 : i32
    %11 = arith.cmpi eq, %4, %c-1_i32 : i32
    %12 = arith.extui %11 : i1 to i32
    %c0_i32_3 = arith.constant 0 : i32
    %13 = arith.cmpi ne, %12, %c0_i32_3 : i32
    scf.if %13 {
      %c0 = arith.constant 0 : index
      %c0_41 = arith.constant 0 : index
      %c0_42 = arith.constant 0 : index
      %77 = vector.load %arg2[%c0, %c0_41, %c0_42] : memref<4x8x256xf32, #tpu.memory_space<vmem>>, vector<1x8x256xf32>
      %78 = vector.shape_cast %77 : vector<1x8x256xf32> to vector<8x256xf32>
      %c255_i32 = arith.constant 255 : i32
      %79 = tpu.dynamic_rotate %78 by %c255_i32 dim 1 : vector<8x256xf32>, i32 -> vector<8x256xf32>
      %c255_i32_43 = arith.constant 255 : i32
      %80 = vector.broadcast %c255_i32_43 : i32 to vector<8x256xi32>
      %81 = arith.cmpi eq, %0, %80 : vector<8x256xi32>
      %82 = vector.extract_strided_slice %78 {offsets = [0, 254], sizes = [8, 1], strides = [1, 1]} : vector<8x256xf32> to vector<8x1xf32>
      %83 = vector.shape_cast %82 : vector<8x1xf32> to vector<8x1xf32>
      %84 = vector.broadcast %83 : vector<8x1xf32> to vector<8x256xf32>
      %85 = arith.select %81, %84, %79 : vector<8x256xi1>, vector<8x256xf32>
      %c0_44 = arith.constant 0 : index
      %c0_45 = arith.constant 0 : index
      %c0_46 = arith.constant 0 : index
      %86 = vector.load %arg3[%c0_44, %c0_45, %c0_46] : memref<4x8x256xf32, #tpu.memory_space<vmem>>, vector<1x8x256xf32>
      %87 = vector.shape_cast %86 : vector<1x8x256xf32> to vector<8x256xf32>
      %88 = vector.shape_cast %85 : vector<8x256xf32> to vector<1x8x256xf32>
      tpu.vector_store %arg3[%c0_44, %c0_45, %c0_46], %88 {strides = array<i32>} : memref<4x8x256xf32, #tpu.memory_space<vmem>>, vector<1x8x256xf32>,
    } else {
    }
    %c2_i32 = arith.constant 2 : i32
    %14 = arith.cmpi eq, %4, %c2_i32 : i32
    %15 = arith.extui %14 : i1 to i32
    %c0_i32_4 = arith.constant 0 : i32
    %16 = arith.cmpi ne, %15, %c0_i32_4 : i32
    scf.if %16 {
      %c0 = arith.constant 0 : index
      %c0_41 = arith.constant 0 : index
      %c0_42 = arith.constant 0 : index
      %77 = vector.load %arg2[%c0, %c0_41, %c0_42] : memref<4x8x256xf32, #tpu.memory_space<vmem>>, vector<1x8x256xf32>
      %78 = vector.shape_cast %77 : vector<1x8x256xf32> to vector<8x256xf32>
      %c2_i32_43 = arith.constant 2 : i32
      %79 = tpu.dynamic_rotate %78 by %c2_i32_43 dim 1 : vector<8x256xf32>, i32 -> vector<8x256xf32>
      %c0_i32_44 = arith.constant 0 : i32
      %80 = vector.broadcast %c0_i32_44 : i32 to vector<8x256xi32>
      %81 = arith.cmpi eq, %0, %80 : vector<8x256xi32>
      %82 = vector.extract_strided_slice %78 {offsets = [0, 2], sizes = [8, 1], strides = [1, 1]} : vector<8x256xf32> to vector<8x1xf32>
      %83 = vector.shape_cast %82 : vector<8x1xf32> to vector<8x1xf32>
      %84 = vector.broadcast %83 : vector<8x1xf32> to vector<8x256xf32>
      %85 = arith.select %81, %84, %79 : vector<8x256xi1>, vector<8x256xf32>
      %c1_i32_45 = arith.constant 1 : i32
      %86 = vector.broadcast %c1_i32_45 : i32 to vector<8x256xi32>
      %87 = arith.cmpi eq, %0, %86 : vector<8x256xi32>
      %88 = vector.extract_strided_slice %78 {offsets = [0, 1], sizes = [8, 1], strides = [1, 1]} : vector<8x256xf32> to vector<8x1xf32>
      %89 = vector.shape_cast %88 : vector<8x1xf32> to vector<8x1xf32>
      %90 = vector.broadcast %89 : vector<8x1xf32> to vector<8x256xf32>
      %91 = arith.select %87, %90, %85 : vector<8x256xi1>, vector<8x256xf32>
      %c0_46 = arith.constant 0 : index
      %c0_47 = arith.constant 0 : index
      %c0_48 = arith.constant 0 : index
      %92 = vector.load %arg3[%c0_46, %c0_47, %c0_48] : memref<4x8x256xf32, #tpu.memory_space<vmem>>, vector<1x8x256xf32>
      %93 = vector.shape_cast %92 : vector<1x8x256xf32> to vector<8x256xf32>
      %94 = vector.shape_cast %91 : vector<8x256xf32> to vector<1x8x256xf32>
      tpu.vector_store %arg3[%c0_46, %c0_47, %c0_48], %94 {strides = array<i32>} : memref<4x8x256xf32, #tpu.memory_space<vmem>>, vector<1x8x256xf32>,
    } else {
    }
    %c-2_i32 = arith.constant -2 : i32
    %17 = arith.cmpi eq, %4, %c-2_i32 : i32
    %18 = arith.extui %17 : i1 to i32
    %c0_i32_5 = arith.constant 0 : i32
    %19 = arith.cmpi ne, %18, %c0_i32_5 : i32
    scf.if %19 {
      %c0 = arith.constant 0 : index
      %c0_41 = arith.constant 0 : index
      %c0_42 = arith.constant 0 : index
      %77 = vector.load %arg2[%c0, %c0_41, %c0_42] : memref<4x8x256xf32, #tpu.memory_space<vmem>>, vector<1x8x256xf32>
      %78 = vector.shape_cast %77 : vector<1x8x256xf32> to vector<8x256xf32>
      %c254_i32 = arith.constant 254 : i32
      %79 = tpu.dynamic_rotate %78 by %c254_i32 dim 1 : vector<8x256xf32>, i32 -> vector<8x256xf32>
      %c254_i32_43 = arith.constant 254 : i32
      %80 = vector.broadcast %c254_i32_43 : i32 to vector<8x256xi32>
      %81 = arith.cmpi eq, %0, %80 : vector<8x256xi32>
      %82 = vector.extract_strided_slice %78 {offsets = [0, 254], sizes = [8, 1], strides = [1, 1]} : vector<8x256xf32> to vector<8x1xf32>
      %83 = vector.shape_cast %82 : vector<8x1xf32> to vector<8x1xf32>
      %84 = vector.broadcast %83 : vector<8x1xf32> to vector<8x256xf32>
      %85 = arith.select %81, %84, %79 : vector<8x256xi1>, vector<8x256xf32>
      %c255_i32 = arith.constant 255 : i32
      %86 = vector.broadcast %c255_i32 : i32 to vector<8x256xi32>
      %87 = arith.cmpi eq, %0, %86 : vector<8x256xi32>
      %88 = vector.extract_strided_slice %78 {offsets = [0, 253], sizes = [8, 1], strides = [1, 1]} : vector<8x256xf32> to vector<8x1xf32>
      %89 = vector.shape_cast %88 : vector<8x1xf32> to vector<8x1xf32>
      %90 = vector.broadcast %89 : vector<8x1xf32> to vector<8x256xf32>
      %91 = arith.select %87, %90, %85 : vector<8x256xi1>, vector<8x256xf32>
      %c0_44 = arith.constant 0 : index
      %c0_45 = arith.constant 0 : index
      %c0_46 = arith.constant 0 : index
      %92 = vector.load %arg3[%c0_44, %c0_45, %c0_46] : memref<4x8x256xf32, #tpu.memory_space<vmem>>, vector<1x8x256xf32>
      %93 = vector.shape_cast %92 : vector<1x8x256xf32> to vector<8x256xf32>
      %94 = vector.shape_cast %91 : vector<8x256xf32> to vector<1x8x256xf32>
      tpu.vector_store %arg3[%c0_44, %c0_45, %c0_46], %94 {strides = array<i32>} : memref<4x8x256xf32, #tpu.memory_space<vmem>>, vector<1x8x256xf32>,
    } else {
    }
    %c4_i32_6 = arith.constant 4 : i32
    %20 = arith.muli %arg0, %c4_i32_6 : i32
    %c1_i32_7 = arith.constant 1 : i32
    %21 = arith.addi %20, %c1_i32_7 : i32
    %22 = arith.index_cast %21 : i32 to index
    %23 = memref.load %arg1[%22] : memref<8xi32, #tpu.memory_space<smem>>
    %c0_i32_8 = arith.constant 0 : i32
    %24 = arith.cmpi eq, %23, %c0_i32_8 : i32
    %25 = arith.extui %24 : i1 to i32
    %c0_i32_9 = arith.constant 0 : i32
    %26 = arith.cmpi ne, %25, %c0_i32_9 : i32
    scf.if %26 {
      %c1 = arith.constant 1 : index
      %c0 = arith.constant 0 : index
      %c0_41 = arith.constant 0 : index
      %77 = vector.load %arg2[%c1, %c0, %c0_41] : memref<4x8x256xf32, #tpu.memory_space<vmem>>, vector<1x8x256xf32>
      %78 = vector.shape_cast %77 : vector<1x8x256xf32> to vector<8x256xf32>
      %c1_42 = arith.constant 1 : index
      %c0_43 = arith.constant 0 : index
      %c0_44 = arith.constant 0 : index
      %79 = vector.load %arg3[%c1_42, %c0_43, %c0_44] : memref<4x8x256xf32, #tpu.memory_space<vmem>>, vector<1x8x256xf32>
      %80 = vector.shape_cast %79 : vector<1x8x256xf32> to vector<8x256xf32>
      %81 = vector.shape_cast %78 : vector<8x256xf32> to vector<1x8x256xf32>
      tpu.vector_store %arg3[%c1_42, %c0_43, %c0_44], %81 {strides = array<i32>} : memref<4x8x256xf32, #tpu.memory_space<vmem>>, vector<1x8x256xf32>,
    } else {
    }
    %c1_i32_10 = arith.constant 1 : i32
    %27 = arith.cmpi eq, %23, %c1_i32_10 : i32
    %28 = arith.extui %27 : i1 to i32
    %c0_i32_11 = arith.constant 0 : i32
    %29 = arith.cmpi ne, %28, %c0_i32_11 : i32
    scf.if %29 {
      %c1 = arith.constant 1 : index
      %c0 = arith.constant 0 : index
      %c0_41 = arith.constant 0 : index
      %77 = vector.load %arg2[%c1, %c0, %c0_41] : memref<4x8x256xf32, #tpu.memory_space<vmem>>, vector<1x8x256xf32>
      %78 = vector.shape_cast %77 : vector<1x8x256xf32> to vector<8x256xf32>
      %c1_i32_42 = arith.constant 1 : i32
      %79 = tpu.dynamic_rotate %78 by %c1_i32_42 dim 1 : vector<8x256xf32>, i32 -> vector<8x256xf32>
      %c0_i32_43 = arith.constant 0 : i32
      %80 = vector.broadcast %c0_i32_43 : i32 to vector<8x256xi32>
      %81 = arith.cmpi eq, %0, %80 : vector<8x256xi32>
      %82 = vector.extract_strided_slice %78 {offsets = [0, 1], sizes = [8, 1], strides = [1, 1]} : vector<8x256xf32> to vector<8x1xf32>
      %83 = vector.shape_cast %82 : vector<8x1xf32> to vector<8x1xf32>
      %84 = vector.broadcast %83 : vector<8x1xf32> to vector<8x256xf32>
      %85 = arith.select %81, %84, %79 : vector<8x256xi1>, vector<8x256xf32>
      %c1_44 = arith.constant 1 : index
      %c0_45 = arith.constant 0 : index
      %c0_46 = arith.constant 0 : index
      %86 = vector.load %arg3[%c1_44, %c0_45, %c0_46] : memref<4x8x256xf32, #tpu.memory_space<vmem>>, vector<1x8x256xf32>
      %87 = vector.shape_cast %86 : vector<1x8x256xf32> to vector<8x256xf32>
      %88 = vector.shape_cast %85 : vector<8x256xf32> to vector<1x8x256xf32>
      tpu.vector_store %arg3[%c1_44, %c0_45, %c0_46], %88 {strides = array<i32>} : memref<4x8x256xf32, #tpu.memory_space<vmem>>, vector<1x8x256xf32>,
    } else {
    }
    %c-1_i32_12 = arith.constant -1 : i32
    %30 = arith.cmpi eq, %23, %c-1_i32_12 : i32
    %31 = arith.extui %30 : i1 to i32
    %c0_i32_13 = arith.constant 0 : i32
    %32 = arith.cmpi ne, %31, %c0_i32_13 : i32
    scf.if %32 {
      %c1 = arith.constant 1 : index
      %c0 = arith.constant 0 : index
      %c0_41 = arith.constant 0 : index
      %77 = vector.load %arg2[%c1, %c0, %c0_41] : memref<4x8x256xf32, #tpu.memory_space<vmem>>, vector<1x8x256xf32>
      %78 = vector.shape_cast %77 : vector<1x8x256xf32> to vector<8x256xf32>
      %c255_i32 = arith.constant 255 : i32
      %79 = tpu.dynamic_rotate %78 by %c255_i32 dim 1 : vector<8x256xf32>, i32 -> vector<8x256xf32>
      %c255_i32_42 = arith.constant 255 : i32
      %80 = vector.broadcast %c255_i32_42 : i32 to vector<8x256xi32>
      %81 = arith.cmpi eq, %0, %80 : vector<8x256xi32>
      %82 = vector.extract_strided_slice %78 {offsets = [0, 254], sizes = [8, 1], strides = [1, 1]} : vector<8x256xf32> to vector<8x1xf32>
      %83 = vector.shape_cast %82 : vector<8x1xf32> to vector<8x1xf32>
      %84 = vector.broadcast %83 : vector<8x1xf32> to vector<8x256xf32>
      %85 = arith.select %81, %84, %79 : vector<8x256xi1>, vector<8x256xf32>
      %c1_43 = arith.constant 1 : index
      %c0_44 = arith.constant 0 : index
      %c0_45 = arith.constant 0 : index
      %86 = vector.load %arg3[%c1_43, %c0_44, %c0_45] : memref<4x8x256xf32, #tpu.memory_space<vmem>>, vector<1x8x256xf32>
      %87 = vector.shape_cast %86 : vector<1x8x256xf32> to vector<8x256xf32>
      %88 = vector.shape_cast %85 : vector<8x256xf32> to vector<1x8x256xf32>
      tpu.vector_store %arg3[%c1_43, %c0_44, %c0_45], %88 {strides = array<i32>} : memref<4x8x256xf32, #tpu.memory_space<vmem>>, vector<1x8x256xf32>,
    } else {
    }
    %c2_i32_14 = arith.constant 2 : i32
    %33 = arith.cmpi eq, %23, %c2_i32_14 : i32
    %34 = arith.extui %33 : i1 to i32
    %c0_i32_15 = arith.constant 0 : i32
    %35 = arith.cmpi ne, %34, %c0_i32_15 : i32
    scf.if %35 {
      %c1 = arith.constant 1 : index
      %c0 = arith.constant 0 : index
      %c0_41 = arith.constant 0 : index
      %77 = vector.load %arg2[%c1, %c0, %c0_41] : memref<4x8x256xf32, #tpu.memory_space<vmem>>, vector<1x8x256xf32>
      %78 = vector.shape_cast %77 : vector<1x8x256xf32> to vector<8x256xf32>
      %c2_i32_42 = arith.constant 2 : i32
      %79 = tpu.dynamic_rotate %78 by %c2_i32_42 dim 1 : vector<8x256xf32>, i32 -> vector<8x256xf32>
      %c0_i32_43 = arith.constant 0 : i32
      %80 = vector.broadcast %c0_i32_43 : i32 to vector<8x256xi32>
      %81 = arith.cmpi eq, %0, %80 : vector<8x256xi32>
      %82 = vector.extract_strided_slice %78 {offsets = [0, 2], sizes = [8, 1], strides = [1, 1]} : vector<8x256xf32> to vector<8x1xf32>
      %83 = vector.shape_cast %82 : vector<8x1xf32> to vector<8x1xf32>
      %84 = vector.broadcast %83 : vector<8x1xf32> to vector<8x256xf32>
      %85 = arith.select %81, %84, %79 : vector<8x256xi1>, vector<8x256xf32>
      %c1_i32_44 = arith.constant 1 : i32
      %86 = vector.broadcast %c1_i32_44 : i32 to vector<8x256xi32>
      %87 = arith.cmpi eq, %0, %86 : vector<8x256xi32>
      %88 = vector.extract_strided_slice %78 {offsets = [0, 1], sizes = [8, 1], strides = [1, 1]} : vector<8x256xf32> to vector<8x1xf32>
      %89 = vector.shape_cast %88 : vector<8x1xf32> to vector<8x1xf32>
      %90 = vector.broadcast %89 : vector<8x1xf32> to vector<8x256xf32>
      %91 = arith.select %87, %90, %85 : vector<8x256xi1>, vector<8x256xf32>
      %c1_45 = arith.constant 1 : index
      %c0_46 = arith.constant 0 : index
      %c0_47 = arith.constant 0 : index
      %92 = vector.load %arg3[%c1_45, %c0_46, %c0_47] : memref<4x8x256xf32, #tpu.memory_space<vmem>>, vector<1x8x256xf32>
      %93 = vector.shape_cast %92 : vector<1x8x256xf32> to vector<8x256xf32>
      %94 = vector.shape_cast %91 : vector<8x256xf32> to vector<1x8x256xf32>
      tpu.vector_store %arg3[%c1_45, %c0_46, %c0_47], %94 {strides = array<i32>} : memref<4x8x256xf32, #tpu.memory_space<vmem>>, vector<1x8x256xf32>,
    } else {
    }
    %c-2_i32_16 = arith.constant -2 : i32
    %36 = arith.cmpi eq, %23, %c-2_i32_16 : i32
    %37 = arith.extui %36 : i1 to i32
    %c0_i32_17 = arith.constant 0 : i32
    %38 = arith.cmpi ne, %37, %c0_i32_17 : i32
    scf.if %38 {
      %c1 = arith.constant 1 : index
      %c0 = arith.constant 0 : index
      %c0_41 = arith.constant 0 : index
      %77 = vector.load %arg2[%c1, %c0, %c0_41] : memref<4x8x256xf32, #tpu.memory_space<vmem>>, vector<1x8x256xf32>
      %78 = vector.shape_cast %77 : vector<1x8x256xf32> to vector<8x256xf32>
      %c254_i32 = arith.constant 254 : i32
      %79 = tpu.dynamic_rotate %78 by %c254_i32 dim 1 : vector<8x256xf32>, i32 -> vector<8x256xf32>
      %c254_i32_42 = arith.constant 254 : i32
      %80 = vector.broadcast %c254_i32_42 : i32 to vector<8x256xi32>
      %81 = arith.cmpi eq, %0, %80 : vector<8x256xi32>
      %82 = vector.extract_strided_slice %78 {offsets = [0, 254], sizes = [8, 1], strides = [1, 1]} : vector<8x256xf32> to vector<8x1xf32>
      %83 = vector.shape_cast %82 : vector<8x1xf32> to vector<8x1xf32>
      %84 = vector.broadcast %83 : vector<8x1xf32> to vector<8x256xf32>
      %85 = arith.select %81, %84, %79 : vector<8x256xi1>, vector<8x256xf32>
      %c255_i32 = arith.constant 255 : i32
      %86 = vector.broadcast %c255_i32 : i32 to vector<8x256xi32>
      %87 = arith.cmpi eq, %0, %86 : vector<8x256xi32>
      %88 = vector.extract_strided_slice %78 {offsets = [0, 253], sizes = [8, 1], strides = [1, 1]} : vector<8x256xf32> to vector<8x1xf32>
      %89 = vector.shape_cast %88 : vector<8x1xf32> to vector<8x1xf32>
      %90 = vector.broadcast %89 : vector<8x1xf32> to vector<8x256xf32>
      %91 = arith.select %87, %90, %85 : vector<8x256xi1>, vector<8x256xf32>
      %c1_43 = arith.constant 1 : index
      %c0_44 = arith.constant 0 : index
      %c0_45 = arith.constant 0 : index
      %92 = vector.load %arg3[%c1_43, %c0_44, %c0_45] : memref<4x8x256xf32, #tpu.memory_space<vmem>>, vector<1x8x256xf32>
      %93 = vector.shape_cast %92 : vector<1x8x256xf32> to vector<8x256xf32>
      %94 = vector.shape_cast %91 : vector<8x256xf32> to vector<1x8x256xf32>
      tpu.vector_store %arg3[%c1_43, %c0_44, %c0_45], %94 {strides = array<i32>} : memref<4x8x256xf32, #tpu.memory_space<vmem>>, vector<1x8x256xf32>,
    } else {
    }
    %c4_i32_18 = arith.constant 4 : i32
    %39 = arith.muli %arg0, %c4_i32_18 : i32
    %c2_i32_19 = arith.constant 2 : i32
    %40 = arith.addi %39, %c2_i32_19 : i32
    %41 = arith.index_cast %40 : i32 to index
    %42 = memref.load %arg1[%41] : memref<8xi32, #tpu.memory_space<smem>>
    %c0_i32_20 = arith.constant 0 : i32
    %43 = arith.cmpi eq, %42, %c0_i32_20 : i32
    %44 = arith.extui %43 : i1 to i32
    %c0_i32_21 = arith.constant 0 : i32
    %45 = arith.cmpi ne, %44, %c0_i32_21 : i32
    scf.if %45 {
      %c2 = arith.constant 2 : index
      %c0 = arith.constant 0 : index
      %c0_41 = arith.constant 0 : index
      %77 = vector.load %arg2[%c2, %c0, %c0_41] : memref<4x8x256xf32, #tpu.memory_space<vmem>>, vector<1x8x256xf32>
      %78 = vector.shape_cast %77 : vector<1x8x256xf32> to vector<8x256xf32>
      %c2_42 = arith.constant 2 : index
      %c0_43 = arith.constant 0 : index
      %c0_44 = arith.constant 0 : index
      %79 = vector.load %arg3[%c2_42, %c0_43, %c0_44] : memref<4x8x256xf32, #tpu.memory_space<vmem>>, vector<1x8x256xf32>
      %80 = vector.shape_cast %79 : vector<1x8x256xf32> to vector<8x256xf32>
      %81 = vector.shape_cast %78 : vector<8x256xf32> to vector<1x8x256xf32>
      tpu.vector_store %arg3[%c2_42, %c0_43, %c0_44], %81 {strides = array<i32>} : memref<4x8x256xf32, #tpu.memory_space<vmem>>, vector<1x8x256xf32>,
    } else {
    }
    %c1_i32_22 = arith.constant 1 : i32
    %46 = arith.cmpi eq, %42, %c1_i32_22 : i32
    %47 = arith.extui %46 : i1 to i32
    %c0_i32_23 = arith.constant 0 : i32
    %48 = arith.cmpi ne, %47, %c0_i32_23 : i32
    scf.if %48 {
      %c2 = arith.constant 2 : index
      %c0 = arith.constant 0 : index
      %c0_41 = arith.constant 0 : index
      %77 = vector.load %arg2[%c2, %c0, %c0_41] : memref<4x8x256xf32, #tpu.memory_space<vmem>>, vector<1x8x256xf32>
      %78 = vector.shape_cast %77 : vector<1x8x256xf32> to vector<8x256xf32>
      %c1_i32_42 = arith.constant 1 : i32
      %79 = tpu.dynamic_rotate %78 by %c1_i32_42 dim 1 : vector<8x256xf32>, i32 -> vector<8x256xf32>
      %c0_i32_43 = arith.constant 0 : i32
      %80 = vector.broadcast %c0_i32_43 : i32 to vector<8x256xi32>
      %81 = arith.cmpi eq, %0, %80 : vector<8x256xi32>
      %82 = vector.extract_strided_slice %78 {offsets = [0, 1], sizes = [8, 1], strides = [1, 1]} : vector<8x256xf32> to vector<8x1xf32>
      %83 = vector.shape_cast %82 : vector<8x1xf32> to vector<8x1xf32>
      %84 = vector.broadcast %83 : vector<8x1xf32> to vector<8x256xf32>
      %85 = arith.select %81, %84, %79 : vector<8x256xi1>, vector<8x256xf32>
      %c2_44 = arith.constant 2 : index
      %c0_45 = arith.constant 0 : index
      %c0_46 = arith.constant 0 : index
      %86 = vector.load %arg3[%c2_44, %c0_45, %c0_46] : memref<4x8x256xf32, #tpu.memory_space<vmem>>, vector<1x8x256xf32>
      %87 = vector.shape_cast %86 : vector<1x8x256xf32> to vector<8x256xf32>
      %88 = vector.shape_cast %85 : vector<8x256xf32> to vector<1x8x256xf32>
      tpu.vector_store %arg3[%c2_44, %c0_45, %c0_46], %88 {strides = array<i32>} : memref<4x8x256xf32, #tpu.memory_space<vmem>>, vector<1x8x256xf32>,
    } else {
    }
    %c-1_i32_24 = arith.constant -1 : i32
    %49 = arith.cmpi eq, %42, %c-1_i32_24 : i32
    %50 = arith.extui %49 : i1 to i32
    %c0_i32_25 = arith.constant 0 : i32
    %51 = arith.cmpi ne, %50, %c0_i32_25 : i32
    scf.if %51 {
      %c2 = arith.constant 2 : index
      %c0 = arith.constant 0 : index
      %c0_41 = arith.constant 0 : index
      %77 = vector.load %arg2[%c2, %c0, %c0_41] : memref<4x8x256xf32, #tpu.memory_space<vmem>>, vector<1x8x256xf32>
      %78 = vector.shape_cast %77 : vector<1x8x256xf32> to vector<8x256xf32>
      %c255_i32 = arith.constant 255 : i32
      %79 = tpu.dynamic_rotate %78 by %c255_i32 dim 1 : vector<8x256xf32>, i32 -> vector<8x256xf32>
      %c255_i32_42 = arith.constant 255 : i32
      %80 = vector.broadcast %c255_i32_42 : i32 to vector<8x256xi32>
      %81 = arith.cmpi eq, %0, %80 : vector<8x256xi32>
      %82 = vector.extract_strided_slice %78 {offsets = [0, 254], sizes = [8, 1], strides = [1, 1]} : vector<8x256xf32> to vector<8x1xf32>
      %83 = vector.shape_cast %82 : vector<8x1xf32> to vector<8x1xf32>
      %84 = vector.broadcast %83 : vector<8x1xf32> to vector<8x256xf32>
      %85 = arith.select %81, %84, %79 : vector<8x256xi1>, vector<8x256xf32>
      %c2_43 = arith.constant 2 : index
      %c0_44 = arith.constant 0 : index
      %c0_45 = arith.constant 0 : index
      %86 = vector.load %arg3[%c2_43, %c0_44, %c0_45] : memref<4x8x256xf32, #tpu.memory_space<vmem>>, vector<1x8x256xf32>
      %87 = vector.shape_cast %86 : vector<1x8x256xf32> to vector<8x256xf32>
      %88 = vector.shape_cast %85 : vector<8x256xf32> to vector<1x8x256xf32>
      tpu.vector_store %arg3[%c2_43, %c0_44, %c0_45], %88 {strides = array<i32>} : memref<4x8x256xf32, #tpu.memory_space<vmem>>, vector<1x8x256xf32>,
    } else {
    }
    %c2_i32_26 = arith.constant 2 : i32
    %52 = arith.cmpi eq, %42, %c2_i32_26 : i32
    %53 = arith.extui %52 : i1 to i32
    %c0_i32_27 = arith.constant 0 : i32
    %54 = arith.cmpi ne, %53, %c0_i32_27 : i32
    scf.if %54 {
      %c2 = arith.constant 2 : index
      %c0 = arith.constant 0 : index
      %c0_41 = arith.constant 0 : index
      %77 = vector.load %arg2[%c2, %c0, %c0_41] : memref<4x8x256xf32, #tpu.memory_space<vmem>>, vector<1x8x256xf32>
      %78 = vector.shape_cast %77 : vector<1x8x256xf32> to vector<8x256xf32>
      %c2_i32_42 = arith.constant 2 : i32
      %79 = tpu.dynamic_rotate %78 by %c2_i32_42 dim 1 : vector<8x256xf32>, i32 -> vector<8x256xf32>
      %c0_i32_43 = arith.constant 0 : i32
      %80 = vector.broadcast %c0_i32_43 : i32 to vector<8x256xi32>
      %81 = arith.cmpi eq, %0, %80 : vector<8x256xi32>
      %82 = vector.extract_strided_slice %78 {offsets = [0, 2], sizes = [8, 1], strides = [1, 1]} : vector<8x256xf32> to vector<8x1xf32>
      %83 = vector.shape_cast %82 : vector<8x1xf32> to vector<8x1xf32>
      %84 = vector.broadcast %83 : vector<8x1xf32> to vector<8x256xf32>
      %85 = arith.select %81, %84, %79 : vector<8x256xi1>, vector<8x256xf32>
      %c1_i32_44 = arith.constant 1 : i32
      %86 = vector.broadcast %c1_i32_44 : i32 to vector<8x256xi32>
      %87 = arith.cmpi eq, %0, %86 : vector<8x256xi32>
      %88 = vector.extract_strided_slice %78 {offsets = [0, 1], sizes = [8, 1], strides = [1, 1]} : vector<8x256xf32> to vector<8x1xf32>
      %89 = vector.shape_cast %88 : vector<8x1xf32> to vector<8x1xf32>
      %90 = vector.broadcast %89 : vector<8x1xf32> to vector<8x256xf32>
      %91 = arith.select %87, %90, %85 : vector<8x256xi1>, vector<8x256xf32>
      %c2_45 = arith.constant 2 : index
      %c0_46 = arith.constant 0 : index
      %c0_47 = arith.constant 0 : index
      %92 = vector.load %arg3[%c2_45, %c0_46, %c0_47] : memref<4x8x256xf32, #tpu.memory_space<vmem>>, vector<1x8x256xf32>
      %93 = vector.shape_cast %92 : vector<1x8x256xf32> to vector<8x256xf32>
      %94 = vector.shape_cast %91 : vector<8x256xf32> to vector<1x8x256xf32>
      tpu.vector_store %arg3[%c2_45, %c0_46, %c0_47], %94 {strides = array<i32>} : memref<4x8x256xf32, #tpu.memory_space<vmem>>, vector<1x8x256xf32>,
    } else {
    }
    %c-2_i32_28 = arith.constant -2 : i32
    %55 = arith.cmpi eq, %42, %c-2_i32_28 : i32
    %56 = arith.extui %55 : i1 to i32
    %c0_i32_29 = arith.constant 0 : i32
    %57 = arith.cmpi ne, %56, %c0_i32_29 : i32
    scf.if %57 {
      %c2 = arith.constant 2 : index
      %c0 = arith.constant 0 : index
      %c0_41 = arith.constant 0 : index
      %77 = vector.load %arg2[%c2, %c0, %c0_41] : memref<4x8x256xf32, #tpu.memory_space<vmem>>, vector<1x8x256xf32>
      %78 = vector.shape_cast %77 : vector<1x8x256xf32> to vector<8x256xf32>
      %c254_i32 = arith.constant 254 : i32
      %79 = tpu.dynamic_rotate %78 by %c254_i32 dim 1 : vector<8x256xf32>, i32 -> vector<8x256xf32>
      %c254_i32_42 = arith.constant 254 : i32
      %80 = vector.broadcast %c254_i32_42 : i32 to vector<8x256xi32>
      %81 = arith.cmpi eq, %0, %80 : vector<8x256xi32>
      %82 = vector.extract_strided_slice %78 {offsets = [0, 254], sizes = [8, 1], strides = [1, 1]} : vector<8x256xf32> to vector<8x1xf32>
      %83 = vector.shape_cast %82 : vector<8x1xf32> to vector<8x1xf32>
      %84 = vector.broadcast %83 : vector<8x1xf32> to vector<8x256xf32>
      %85 = arith.select %81, %84, %79 : vector<8x256xi1>, vector<8x256xf32>
      %c255_i32 = arith.constant 255 : i32
      %86 = vector.broadcast %c255_i32 : i32 to vector<8x256xi32>
      %87 = arith.cmpi eq, %0, %86 : vector<8x256xi32>
      %88 = vector.extract_strided_slice %78 {offsets = [0, 253], sizes = [8, 1], strides = [1, 1]} : vector<8x256xf32> to vector<8x1xf32>
      %89 = vector.shape_cast %88 : vector<8x1xf32> to vector<8x1xf32>
      %90 = vector.broadcast %89 : vector<8x1xf32> to vector<8x256xf32>
      %91 = arith.select %87, %90, %85 : vector<8x256xi1>, vector<8x256xf32>
      %c2_43 = arith.constant 2 : index
      %c0_44 = arith.constant 0 : index
      %c0_45 = arith.constant 0 : index
      %92 = vector.load %arg3[%c2_43, %c0_44, %c0_45] : memref<4x8x256xf32, #tpu.memory_space<vmem>>, vector<1x8x256xf32>
      %93 = vector.shape_cast %92 : vector<1x8x256xf32> to vector<8x256xf32>
      %94 = vector.shape_cast %91 : vector<8x256xf32> to vector<1x8x256xf32>
      tpu.vector_store %arg3[%c2_43, %c0_44, %c0_45], %94 {strides = array<i32>} : memref<4x8x256xf32, #tpu.memory_space<vmem>>, vector<1x8x256xf32>,
    } else {
    }
    %c4_i32_30 = arith.constant 4 : i32
    %58 = arith.muli %arg0, %c4_i32_30 : i32
    %c3_i32 = arith.constant 3 : i32
    %59 = arith.addi %58, %c3_i32 : i32
    %60 = arith.index_cast %59 : i32 to index
    %61 = memref.load %arg1[%60] : memref<8xi32, #tpu.memory_space<smem>>
    %c0_i32_31 = arith.constant 0 : i32
    %62 = arith.cmpi eq, %61, %c0_i32_31 : i32
    %63 = arith.extui %62 : i1 to i32
    %c0_i32_32 = arith.constant 0 : i32
    %64 = arith.cmpi ne, %63, %c0_i32_32 : i32
    scf.if %64 {
      %c3 = arith.constant 3 : index
      %c0 = arith.constant 0 : index
      %c0_41 = arith.constant 0 : index
      %77 = vector.load %arg2[%c3, %c0, %c0_41] : memref<4x8x256xf32, #tpu.memory_space<vmem>>, vector<1x8x256xf32>
      %78 = vector.shape_cast %77 : vector<1x8x256xf32> to vector<8x256xf32>
      %c3_42 = arith.constant 3 : index
      %c0_43 = arith.constant 0 : index
      %c0_44 = arith.constant 0 : index
      %79 = vector.load %arg3[%c3_42, %c0_43, %c0_44] : memref<4x8x256xf32, #tpu.memory_space<vmem>>, vector<1x8x256xf32>
      %80 = vector.shape_cast %79 : vector<1x8x256xf32> to vector<8x256xf32>
      %81 = vector.shape_cast %78 : vector<8x256xf32> to vector<1x8x256xf32>
      tpu.vector_store %arg3[%c3_42, %c0_43, %c0_44], %81 {strides = array<i32>} : memref<4x8x256xf32, #tpu.memory_space<vmem>>, vector<1x8x256xf32>,
    } else {
    }
    %c1_i32_33 = arith.constant 1 : i32
    %65 = arith.cmpi eq, %61, %c1_i32_33 : i32
    %66 = arith.extui %65 : i1 to i32
    %c0_i32_34 = arith.constant 0 : i32
    %67 = arith.cmpi ne, %66, %c0_i32_34 : i32
    scf.if %67 {
      %c3 = arith.constant 3 : index
      %c0 = arith.constant 0 : index
      %c0_41 = arith.constant 0 : index
      %77 = vector.load %arg2[%c3, %c0, %c0_41] : memref<4x8x256xf32, #tpu.memory_space<vmem>>, vector<1x8x256xf32>
      %78 = vector.shape_cast %77 : vector<1x8x256xf32> to vector<8x256xf32>
      %c1_i32_42 = arith.constant 1 : i32
      %79 = tpu.dynamic_rotate %78 by %c1_i32_42 dim 1 : vector<8x256xf32>, i32 -> vector<8x256xf32>
      %c0_i32_43 = arith.constant 0 : i32
      %80 = vector.broadcast %c0_i32_43 : i32 to vector<8x256xi32>
      %81 = arith.cmpi eq, %0, %80 : vector<8x256xi32>
      %82 = vector.extract_strided_slice %78 {offsets = [0, 1], sizes = [8, 1], strides = [1, 1]} : vector<8x256xf32> to vector<8x1xf32>
      %83 = vector.shape_cast %82 : vector<8x1xf32> to vector<8x1xf32>
      %84 = vector.broadcast %83 : vector<8x1xf32> to vector<8x256xf32>
      %85 = arith.select %81, %84, %79 : vector<8x256xi1>, vector<8x256xf32>
      %c3_44 = arith.constant 3 : index
      %c0_45 = arith.constant 0 : index
      %c0_46 = arith.constant 0 : index
      %86 = vector.load %arg3[%c3_44, %c0_45, %c0_46] : memref<4x8x256xf32, #tpu.memory_space<vmem>>, vector<1x8x256xf32>
      %87 = vector.shape_cast %86 : vector<1x8x256xf32> to vector<8x256xf32>
      %88 = vector.shape_cast %85 : vector<8x256xf32> to vector<1x8x256xf32>
      tpu.vector_store %arg3[%c3_44, %c0_45, %c0_46], %88 {strides = array<i32>} : memref<4x8x256xf32, #tpu.memory_space<vmem>>, vector<1x8x256xf32>,
    } else {
    }
    %c-1_i32_35 = arith.constant -1 : i32
    %68 = arith.cmpi eq, %61, %c-1_i32_35 : i32
    %69 = arith.extui %68 : i1 to i32
    %c0_i32_36 = arith.constant 0 : i32
    %70 = arith.cmpi ne, %69, %c0_i32_36 : i32
    scf.if %70 {
      %c3 = arith.constant 3 : index
      %c0 = arith.constant 0 : index
      %c0_41 = arith.constant 0 : index
      %77 = vector.load %arg2[%c3, %c0, %c0_41] : memref<4x8x256xf32, #tpu.memory_space<vmem>>, vector<1x8x256xf32>
      %78 = vector.shape_cast %77 : vector<1x8x256xf32> to vector<8x256xf32>
      %c255_i32 = arith.constant 255 : i32
      %79 = tpu.dynamic_rotate %78 by %c255_i32 dim 1 : vector<8x256xf32>, i32 -> vector<8x256xf32>
      %c255_i32_42 = arith.constant 255 : i32
      %80 = vector.broadcast %c255_i32_42 : i32 to vector<8x256xi32>
      %81 = arith.cmpi eq, %0, %80 : vector<8x256xi32>
      %82 = vector.extract_strided_slice %78 {offsets = [0, 254], sizes = [8, 1], strides = [1, 1]} : vector<8x256xf32> to vector<8x1xf32>
      %83 = vector.shape_cast %82 : vector<8x1xf32> to vector<8x1xf32>
      %84 = vector.broadcast %83 : vector<8x1xf32> to vector<8x256xf32>
      %85 = arith.select %81, %84, %79 : vector<8x256xi1>, vector<8x256xf32>
      %c3_43 = arith.constant 3 : index
      %c0_44 = arith.constant 0 : index
      %c0_45 = arith.constant 0 : index
      %86 = vector.load %arg3[%c3_43, %c0_44, %c0_45] : memref<4x8x256xf32, #tpu.memory_space<vmem>>, vector<1x8x256xf32>
      %87 = vector.shape_cast %86 : vector<1x8x256xf32> to vector<8x256xf32>
      %88 = vector.shape_cast %85 : vector<8x256xf32> to vector<1x8x256xf32>
      tpu.vector_store %arg3[%c3_43, %c0_44, %c0_45], %88 {strides = array<i32>} : memref<4x8x256xf32, #tpu.memory_space<vmem>>, vector<1x8x256xf32>,
    } else {
    }
    %c2_i32_37 = arith.constant 2 : i32
    %71 = arith.cmpi eq, %61, %c2_i32_37 : i32
    %72 = arith.extui %71 : i1 to i32
    %c0_i32_38 = arith.constant 0 : i32
    %73 = arith.cmpi ne, %72, %c0_i32_38 : i32
    scf.if %73 {
      %c3 = arith.constant 3 : index
      %c0 = arith.constant 0 : index
      %c0_41 = arith.constant 0 : index
      %77 = vector.load %arg2[%c3, %c0, %c0_41] : memref<4x8x256xf32, #tpu.memory_space<vmem>>, vector<1x8x256xf32>
      %78 = vector.shape_cast %77 : vector<1x8x256xf32> to vector<8x256xf32>
      %c2_i32_42 = arith.constant 2 : i32
      %79 = tpu.dynamic_rotate %78 by %c2_i32_42 dim 1 : vector<8x256xf32>, i32 -> vector<8x256xf32>
      %c0_i32_43 = arith.constant 0 : i32
      %80 = vector.broadcast %c0_i32_43 : i32 to vector<8x256xi32>
      %81 = arith.cmpi eq, %0, %80 : vector<8x256xi32>
      %82 = vector.extract_strided_slice %78 {offsets = [0, 2], sizes = [8, 1], strides = [1, 1]} : vector<8x256xf32> to vector<8x1xf32>
      %83 = vector.shape_cast %82 : vector<8x1xf32> to vector<8x1xf32>
      %84 = vector.broadcast %83 : vector<8x1xf32> to vector<8x256xf32>
      %85 = arith.select %81, %84, %79 : vector<8x256xi1>, vector<8x256xf32>
      %c1_i32_44 = arith.constant 1 : i32
      %86 = vector.broadcast %c1_i32_44 : i32 to vector<8x256xi32>
      %87 = arith.cmpi eq, %0, %86 : vector<8x256xi32>
      %88 = vector.extract_strided_slice %78 {offsets = [0, 1], sizes = [8, 1], strides = [1, 1]} : vector<8x256xf32> to vector<8x1xf32>
      %89 = vector.shape_cast %88 : vector<8x1xf32> to vector<8x1xf32>
      %90 = vector.broadcast %89 : vector<8x1xf32> to vector<8x256xf32>
      %91 = arith.select %87, %90, %85 : vector<8x256xi1>, vector<8x256xf32>
      %c3_45 = arith.constant 3 : index
      %c0_46 = arith.constant 0 : index
      %c0_47 = arith.constant 0 : index
      %92 = vector.load %arg3[%c3_45, %c0_46, %c0_47] : memref<4x8x256xf32, #tpu.memory_space<vmem>>, vector<1x8x256xf32>
      %93 = vector.shape_cast %92 : vector<1x8x256xf32> to vector<8x256xf32>
      %94 = vector.shape_cast %91 : vector<8x256xf32> to vector<1x8x256xf32>
      tpu.vector_store %arg3[%c3_45, %c0_46, %c0_47], %94 {strides = array<i32>} : memref<4x8x256xf32, #tpu.memory_space<vmem>>, vector<1x8x256xf32>,
    } else {
    }
    %c-2_i32_39 = arith.constant -2 : i32
    %74 = arith.cmpi eq, %61, %c-2_i32_39 : i32
    %75 = arith.extui %74 : i1 to i32
    %c0_i32_40 = arith.constant 0 : i32
    %76 = arith.cmpi ne, %75, %c0_i32_40 : i32
    scf.if %76 {
      %c3 = arith.constant 3 : index
      %c0 = arith.constant 0 : index
      %c0_41 = arith.constant 0 : index
      %77 = vector.load %arg2[%c3, %c0, %c0_41] : memref<4x8x256xf32, #tpu.memory_space<vmem>>, vector<1x8x256xf32>
      %78 = vector.shape_cast %77 : vector<1x8x256xf32> to vector<8x256xf32>
      %c254_i32 = arith.constant 254 : i32
      %79 = tpu.dynamic_rotate %78 by %c254_i32 dim 1 : vector<8x256xf32>, i32 -> vector<8x256xf32>
      %c254_i32_42 = arith.constant 254 : i32
      %80 = vector.broadcast %c254_i32_42 : i32 to vector<8x256xi32>
      %81 = arith.cmpi eq, %0, %80 : vector<8x256xi32>
      %82 = vector.extract_strided_slice %78 {offsets = [0, 254], sizes = [8, 1], strides = [1, 1]} : vector<8x256xf32> to vector<8x1xf32>
      %83 = vector.shape_cast %82 : vector<8x1xf32> to vector<8x1xf32>
      %84 = vector.broadcast %83 : vector<8x1xf32> to vector<8x256xf32>
      %85 = arith.select %81, %84, %79 : vector<8x256xi1>, vector<8x256xf32>
      %c255_i32 = arith.constant 255 : i32
      %86 = vector.broadcast %c255_i32 : i32 to vector<8x256xi32>
      %87 = arith.cmpi eq, %0, %86 : vector<8x256xi32>
      %88 = vector.extract_strided_slice %78 {offsets = [0, 253], sizes = [8, 1], strides = [1, 1]} : vector<8x256xf32> to vector<8x1xf32>
      %89 = vector.shape_cast %88 : vector<8x1xf32> to vector<8x1xf32>
      %90 = vector.broadcast %89 : vector<8x1xf32> to vector<8x256xf32>
      %91 = arith.select %87, %90, %85 : vector<8x256xi1>, vector<8x256xf32>
      %c3_43 = arith.constant 3 : index
      %c0_44 = arith.constant 0 : index
      %c0_45 = arith.constant 0 : index
      %92 = vector.load %arg3[%c3_43, %c0_44, %c0_45] : memref<4x8x256xf32, #tpu.memory_space<vmem>>, vector<1x8x256xf32>
      %93 = vector.shape_cast %92 : vector<1x8x256xf32> to vector<8x256xf32>
      %94 = vector.shape_cast %91 : vector<8x256xf32> to vector<1x8x256xf32>
      tpu.vector_store %arg3[%c3_43, %c0_44, %c0_45], %94 {strides = array<i32>} : memref<4x8x256xf32, #tpu.memory_space<vmem>>, vector<1x8x256xf32>,
    } else {
    }
    return
  }
  func.func @transform_0(%arg0: i32, %arg1: memref<8xi32, #tpu.memory_space<smem>>) -> (i32, i32, i32) {
    %c0_i32 = arith.constant 0 : i32
    %c0_i32_0 = arith.constant 0 : i32
    %c0_i32_1 = arith.constant 0 : i32
    return %arg0, %c0_i32, %c0_i32_0 : i32, i32, i32
  }
  func.func @transform_1(%arg0: i32, %arg1: memref<8xi32, #tpu.memory_space<smem>>) -> (i32, i32, i32) {
    %c0_i32 = arith.constant 0 : i32
    %c0_i32_0 = arith.constant 0 : i32
    %c0_i32_1 = arith.constant 0 : i32
    return %arg0, %c0_i32, %c0_i32_0 : i32, i32, i32
  }
}

</mosaic_0001>

<llo_original>
// kernel: tpu_custom_call.1
$region0: #{tpu_custom_call.1}
  #allocation0 [shape = 'u32[]', space=smem, size = 0x4, offset = 0x4, fixed_abs, tag = 'smem constant byte address 0x4 - core index']
  #allocation1 [shape = 'u32[144,128]{1,0:T(1,128)}', space=vmem, size = 0x12000, scoped, tag = 'internal scratch']
  #allocation2 [shape = 's32[1]{0}', space=sflag, size = 0x4, scoped, tag = 'scoped memory for tpu_custom_call.1']
  #allocation3 [shape = 'u8[512]{0}', space=smem, size = 0x200, scoped, tag = 'prefetched SMEM operand 0']
  %s0 = inlined_call_operand.hbm [shape: s32[8], index: 0, kind: input, shape index: {}]
  %s1 = inlined_call_operand.hbm [shape: f32[8,8,256], index: 1, kind: input, shape index: {}]
  %s2 = inlined_call_operand.hbm [shape: f32[8,8,256], index: 2, kind: output, shape index: {}]
  %s3 = sld [smem:[#allocation0]]
  $region121: #{tpu_custom_call.1} parent=0
    _
  %s5 = ssub.s32 1, %s3
  %s6 = scalar_select 0, %s5, %s3
  %8 = dma.hbm_to_smem %s0, 16, [#allocation3], [#allocation2]
  %9 = dma.done [#allocation2], 16
  %10 = sfence
  $region1: #{tpu_custom_call.1} parent=0
    #allocation4 [shape = 'u8[65536]{0}', space=vmem, size = 0x10000, scoped, tag = 'input window, operand 1']
    #allocation5 [shape = 's32[2]{0}', space=sflag, size = 0x8, scoped, tag = 'scoped memory for tpu_custom_call.1']
    #allocation6 [shape = 's32[2]{0}', space=sflag, size = 0x8, scoped, tag = 'scoped memory for tpu_custom_call.1']
    #allocation7 [shape = 'u8[65536]{0}', space=vmem, size = 0x10000, scoped, tag = 'output window, operand 0']
    %11 = vsyncpa [#allocation5], 0
    %s12 = scalar_lea.sflag [#allocation5], 1
    %13 = vsyncpa %s12, 0
    %14 = vsyncpa [#allocation6], 0
    %s15 = scalar_lea.sflag [#allocation6], 1
    %16 = vsyncpa %s15, 0
    loop: start=0, step=1, limit=4
    $region2: #{tpu_custom_call.1} parent=1 // loop_pre_header
      _
    $region3: #{tpu_custom_call.1} parent=1 // loop_header
      %s18 = sphi 0, %s22
      %p19 = scmp.ge.s32.totalorder %s18, 4
      %s28 = sphi 0, %s30
      %s31 = sphi 0, %s28
      %s32 = sphi 0, %s31
      %s48 = sphi 0, %s32
      %s54 = sphi 0, %s56
      %s57 = sphi 0, %s54
      %s58 = sphi 0, %s57
      %s74 = sphi 0, %s58
    $region4: #{tpu_custom_call.1} parent=1 // loop_header_branch
      %21 = sbr.rel (%p19) target = $region8
    $region5: #{tpu_custom_call.1} parent=1 // loop_body
      %s23 = ssub.s32 %s18, 1
      %s24 = ssub.s32 %s18, 2
      %s25 = sadd.s32 %s18, 1
      %s26 = ssub.s32 %s18, %s25
      %p27 = scmp.eq.s32.totalorder %s26, 0
      %s29 = sadd.s32 %s28, 1
      %s30 = scalar_select %p27, %s28, %s29
      %p33 = pneg %p27
      %p34 = scmp.eq.s32.totalorder %s18, 1
      %p35 = por %p33, %p34
      %p36 = scmp.ne.s32.totalorder %s28, %s31
      %p37 = scmp.eq.s32.totalorder %s18, 0
      %p38 = por %p36, %p37
      %p39 = scmp.ne.s32.totalorder %s28, %s31
      %p40 = scmp.eq.s32.totalorder %s23, 1
      %p41 = por %p39, %p40
      %p42 = scmp.ne.s32.totalorder %s31, %s32
      %p43 = scmp.eq.s32.totalorder %s23, 0
      %p44 = por %p42, %p43
      %p45 = scmp.ne.s32.totalorder %s31, %s32
      %p46 = scmp.eq.s32.totalorder %s24, 1
      %p47 = por %p45, %p46
      %p49 = scmp.ne.s32.totalorder %s32, %s48
      %p50 = scmp.eq.s32.totalorder %s24, 0
      %p51 = por %p49, %p50
      %s52 = ssub.s32 %s18, %s25
      %p53 = scmp.eq.s32.totalorder %s52, 0
      %s55 = sadd.s32 %s54, 1
      %s56 = scalar_select %p53, %s54, %s55
      %p59 = pneg %p53
      %p60 = scmp.eq.s32.totalorder %s18, 1
      %p61 = por %p59, %p60
      %p62 = scmp.ne.s32.totalorder %s54, %s57
      %p63 = scmp.eq.s32.totalorder %s18, 0
      %p64 = por %p62, %p63
      %p65 = scmp.ne.s32.totalorder %s54, %s57
      %p66 = scmp.eq.s32.totalorder %s23, 1
      %p67 = por %p65, %p66
      %p68 = scmp.ne.s32.totalorder %s57, %s58
      %p69 = scmp.eq.s32.totalorder %s23, 0
      %p70 = por %p68, %p69
      %p71 = scmp.ne.s32.totalorder %s57, %s58
      %p72 = scmp.eq.s32.totalorder %s24, 1
      %p73 = por %p71, %p72
      %p75 = scmp.ne.s32.totalorder %s58, %s74
      %p76 = scmp.eq.s32.totalorder %s24, 0
      %p77 = por %p75, %p76
      %p78 = scmp.le.s32.totalorder 1, %s18
      %p79 = scmp.lt.s32.totalorder %s18, 3
      %p80 = pnand %p78, %p79
      %p81 = pneg %p80
      // Predicated region
      $region9: #{tpu_custom_call.1} parent=5 // pred_check
        _
      $region10: #{tpu_custom_call.1} parent=5 // pred_check_branch
        %83 = sbr.rel (%p80) target = $region12
      $region11: #{tpu_custom_call.1} parent=5 // pred_region
        %s84 = ssub.s32 %s18, 1
      $region12: #{tpu_custom_call.1} parent=5 // pred_fallthru
        _
      %p85 = scmp.lt.s32.totalorder %s18, 2
      // Predicated region
      $region13: #{tpu_custom_call.1} parent=5 // pred_check
        %p86 = pneg %p85
      $region14: #{tpu_custom_call.1} parent=5 // pred_check_branch
        %88 = sbr.rel (%p86) target = $region16
      $region15: #{tpu_custom_call.1} parent=5 // pred_region
        // Predicated region
        $region17: #{tpu_custom_call.1} parent=15 // pred_check
          %p89 = pneg %p38
        $region18: #{tpu_custom_call.1} parent=15 // pred_check_branch
          %91 = sbr.rel (%p89) target = $region20
        $region19: #{tpu_custom_call.1} parent=15 // pred_region
          %s92 = sand.u32 %s28, 1
          %s93 = scalar_lea.sflag [#allocation5], %s92
          %s94 = sand.u32 %s28, 1
          %s95 = smul.addr %s94, 64
          %s96 = scalar_lea.vmem [#allocation4], %s95
          %s97 = smul.u32 4, %s18
          %s99 = ssub.s32 1024, 1024
          %100 = vsyncadd %s93, %s99
          %s101 = smul.addr %s97, 2
          %s102 = smul.addr %s101, 128
          %s103 = scalar_lea.hbm %s1, %s102
          %s104 = sshll.u32 %s96, 4
          %s105 = int_to_ptr.vmem [resolvable:$true] %s104
          %110 = dma.hbm_to_vmem [thread:$0]  %s103, 1024, %s105, %s93, 256, 256, 16
        $region20: #{tpu_custom_call.1} parent=15 // pred_fallthru
          _
      $region16: #{tpu_custom_call.1} parent=5 // pred_fallthru
        _
      %p111 = scmp.le.s32.totalorder 1, %s18
      %p112 = scmp.lt.s32.totalorder %s18, 3
      %p113 = pnand %p111, %p112
      %p114 = pneg %p113
      // Predicated region
      $region21: #{tpu_custom_call.1} parent=5 // pred_check
        _
      $region22: #{tpu_custom_call.1} parent=5 // pred_check_branch
        %116 = sbr.rel (%p113) target = $region24
      $region23: #{tpu_custom_call.1} parent=5 // pred_region
        %s117 = ssub.s32 %s18, 1
        %s118 = sand.u32 %s31, 1
        %s119 = scalar_lea.sflag [#allocation5], %s118
        %s120 = sand.u32 %s31, 1
        %s121 = smul.addr %s120, 64
        %s122 = scalar_lea.vmem [#allocation4], %s121
        // Predicated region
        $region25: #{tpu_custom_call.1} parent=23 // pred_check
          %p123 = pneg %p44
        $region26: #{tpu_custom_call.1} parent=23 // pred_check_branch
          %125 = sbr.rel (%p123) target = $region28
        $region27: #{tpu_custom_call.1} parent=23 // pred_region
          %126 = dma.done %s119, 1024
        $region28: #{tpu_custom_call.1} parent=23 // pred_fallthru
          _
        %s127 = sand.u32 %s31, 1
        %s128 = scalar_lea.sflag [#allocation5], %s127
        %s129 = sand.u32 %s31, 1
        %s130 = smul.addr %s129, 64
        %s131 = scalar_lea.vmem [#allocation4], %s130
        %p132 = pneg %p44
        %p133 = pneg %p41
        %p134 = pneg %p70
        %p135 = pneg %p67
        %s136 = sand.u32 %s57, 1
        %s137 = scalar_lea.sflag [#allocation6], %s136
        %s138 = sand.u32 %s57, 1
        %s139 = smul.addr %s138, 64
        %s140 = scalar_lea.vmem [#allocation7], %s139
        %s141 = smul.u32 4, %s23
        %s142 = smul.u32 4, %s23
        %v143 = vlaneseq
        %v144 = vand.u32 %v143, 127
        %v145 = vadd.s32 %v144, 128
        %s146 = smul.u32 %s23, 4
        %s147 = sld [smem:[#allocation3 + %s146]]
        %p148 = scmp.eq.s32.totalorder %s147, 0
        // Predicated region
        $region29: #{tpu_custom_call.1} parent=23 // pred_check
          %p149 = pneg %p148
        $region30: #{tpu_custom_call.1} parent=23 // pred_check_branch
          %151 = sbr.rel (%p149) target = $region32
        $region31: #{tpu_custom_call.1} parent=23 // pred_region
          %v152 = vld [vmem:[%s122] sm:$0xff]
          %v153 = vld [vmem:[%s122 + $0x8] sm:$0xff]
          %154 = vst [vmem:[%s140] sm:$0xff] %v152
          %155 = vst [vmem:[%s140 + $0x8] sm:$0xff] %v153
        $region32: #{tpu_custom_call.1} parent=23 // pred_fallthru
          _
        %p156 = scmp.eq.s32.totalorder %s147, 1
        // Predicated region
        $region33: #{tpu_custom_call.1} parent=23 // pred_check
          %p157 = pneg %p156
        $region34: #{tpu_custom_call.1} parent=23 // pred_check_branch
          %159 = sbr.rel (%p157) target = $region36
        $region35: #{tpu_custom_call.1} parent=23 // pred_region
          %v160 = vld [vmem:[%s122] sm:$0xff]
          %v161 = vld [vmem:[%s122 + $0x8] sm:$0xff]
          %162 = vrot.lane.b32.xlu0 %v160, 1
          %v163 = vpop.permute.xlu0 %162
          %164 = vrot.lane.b32.xlu0 %v161, 1
          %v165 = vpop.permute.xlu0 %164
          %vm166 = vcmp.lt.s32.totalorder %v144, 1
          %v167 = vsel %vm166, %v163, %v165
          %v168 = vsel %vm166, %v165, %v163
          %vm169 = vcmp.eq.s32.totalorder %v144, 0
          %vm170 = vcmp.eq.s32.totalorder %v145, 0
          %172 = vset.pattern.permute.xlu0 1
          %173 = vperm.xlu0 %172, %v160
          %v174 = vpop.permute.xlu0 %173
          %v176 = vsel %vm169, %v174, %v168
          %v177 = vsel %vm170, %v174, %v167
          %178 = vst [vmem:[%s140] sm:$0xff] %v176
          %179 = vst [vmem:[%s140 + $0x8] sm:$0xff] %v177
        $region36: #{tpu_custom_call.1} parent=23 // pred_fallthru
          _
        %p180 = scmp.eq.s32.totalorder %s147, 4294967295
        // Predicated region
        $region37: #{tpu_custom_call.1} parent=23 // pred_check
          %p181 = pneg %p180
        $region38: #{tpu_custom_call.1} parent=23 // pred_check_branch
          %183 = sbr.rel (%p181) target = $region40
        $region39: #{tpu_custom_call.1} parent=23 // pred_region
          %v184 = vld [vmem:[%s122] sm:$0xff]
          %v185 = vld [vmem:[%s122 + $0x8] sm:$0xff]
          %186 = vrot.lane.b32.xlu0 %v184, 127
          %v187 = vpop.permute.xlu0 %186
          %188 = vrot.lane.b32.xlu0 %v185, 127
          %v189 = vpop.permute.xlu0 %188
          %vm190 = vcmp.lt.s32.totalorder %v144, 127
          %v191 = vsel %vm190, %v187, %v189
          %v192 = vsel %vm190, %v189, %v187
          %vm193 = vcmp.eq.s32.totalorder %v144, 255
          %vm194 = vcmp.eq.s32.totalorder %v145, 255
          %196 = vset.pattern.permute.xlu0 126
          %197 = vperm.xlu0 %196, %v185
          %v198 = vpop.permute.xlu0 %197
          %v200 = vsel %vm193, %v198, %v191
          %v201 = vsel %vm194, %v198, %v192
          %202 = vst [vmem:[%s140] sm:$0xff] %v200
          %203 = vst [vmem:[%s140 + $0x8] sm:$0xff] %v201
        $region40: #{tpu_custom_call.1} parent=23 // pred_fallthru
          _
        %p204 = scmp.eq.s32.totalorder %s147, 2
        // Predicated region
        $region41: #{tpu_custom_call.1} parent=23 // pred_check
          %p205 = pneg %p204
        $region42: #{tpu_custom_call.1} parent=23 // pred_check_branch
          %207 = sbr.rel (%p205) target = $region44
        $region43: #{tpu_custom_call.1} parent=23 // pred_region
          %v208 = vld [vmem:[%s122] sm:$0xff]
          %v209 = vld [vmem:[%s122 + $0x8] sm:$0xff]
          %210 = vrot.lane.b32.xlu0 %v208, 2
          %v211 = vpop.permute.xlu0 %210
          %212 = vrot.lane.b32.xlu0 %v209, 2
          %v213 = vpop.permute.xlu0 %212
          %vm214 = vcmp.lt.s32.totalorder %v144, 2
          %v215 = vsel %vm214, %v211, %v213
          %v216 = vsel %vm214, %v213, %v211
          %vm217 = vcmp.eq.s32.totalorder %v144, 0
          %vm218 = vcmp.eq.s32.totalorder %v145, 0
          %220 = vset.pattern.permute.xlu0 2
          %221 = vperm.xlu0 %220, %v208
          %v222 = vpop.permute.xlu0 %221
          %v224 = vsel %vm217, %v222, %v216
          %v225 = vsel %vm218, %v222, %v215
          %vm226 = vcmp.eq.s32.totalorder %v144, 1
          %vm227 = vcmp.eq.s32.totalorder %v145, 1
          %228 = vset.pattern.permute.xlu0 1
          %229 = vperm.xlu0 %228, %v208
          %v230 = vpop.permute.xlu0 %229
          %v232 = vsel %vm226, %v230, %v224
          %v233 = vsel %vm227, %v230, %v225
          %234 = vst [vmem:[%s140] sm:$0xff] %v232
          %235 = vst [vmem:[%s140 + $0x8] sm:$0xff] %v233
        $region44: #{tpu_custom_call.1} parent=23 // pred_fallthru
          _
        %p236 = scmp.eq.s32.totalorder %s147, 4294967294
        // Predicated region
        $region45: #{tpu_custom_call.1} parent=23 // pred_check
          %p237 = pneg %p236
        $region46: #{tpu_custom_call.1} parent=23 // pred_check_branch
          %239 = sbr.rel (%p237) target = $region48
        $region47: #{tpu_custom_call.1} parent=23 // pred_region
          %v240 = vld [vmem:[%s122] sm:$0xff]
          %v241 = vld [vmem:[%s122 + $0x8] sm:$0xff]
          %242 = vrot.lane.b32.xlu0 %v240, 126
          %v243 = vpop.permute.xlu0 %242
          %244 = vrot.lane.b32.xlu0 %v241, 126
          %v245 = vpop.permute.xlu0 %244
          %vm246 = vcmp.lt.s32.totalorder %v144, 126
          %v247 = vsel %vm246, %v243, %v245
          %v248 = vsel %vm246, %v245, %v243
          %vm249 = vcmp.eq.s32.totalorder %v144, 254
          %vm250 = vcmp.eq.s32.totalorder %v145, 254
          %252 = vset.pattern.permute.xlu0 126
          %253 = vperm.xlu0 %252, %v241
          %v254 = vpop.permute.xlu0 %253
          %v256 = vsel %vm249, %v254, %v247
          %v257 = vsel %vm250, %v254, %v248
          %vm258 = vcmp.eq.s32.totalorder %v144, 255
          %vm259 = vcmp.eq.s32.totalorder %v145, 255
          %260 = vset.pattern.permute.xlu0 125
          %261 = vperm.xlu0 %260, %v241
          %v262 = vpop.permute.xlu0 %261
          %v264 = vsel %vm258, %v262, %v256
          %v265 = vsel %vm259, %v262, %v257
          %266 = vst [vmem:[%s140] sm:$0xff] %v264
          %267 = vst [vmem:[%s140 + $0x8] sm:$0xff] %v265
        $region48: #{tpu_custom_call.1} parent=23 // pred_fallthru
          _
        %s268 = sadd.s32 %s146, 1
        %s269 = sld [smem:[#allocation3 + %s268]]
        %p270 = scmp.eq.s32.totalorder %s269, 0
        // Predicated region
        $region49: #{tpu_custom_call.1} parent=23 // pred_check
          %p271 = pneg %p270
        $region50: #{tpu_custom_call.1} parent=23 // pred_check_branch
          %273 = sbr.rel (%p271) target = $region52
        $region51: #{tpu_custom_call.1} parent=23 // pred_region
          %s274 = scalar_lea.vmem %s122, 16 [#allocation4]
          %v275 = vld [vmem:[%s274] sm:$0xff]
          %v276 = vld [vmem:[%s274 + $0x8] sm:$0xff]
          %s277 = scalar_lea.vmem %s140, 16 [#allocation7]
          %278 = vst [vmem:[%s277] sm:$0xff] %v275
          %279 = vst [vmem:[%s277 + $0x8] sm:$0xff] %v276
        $region52: #{tpu_custom_call.1} parent=23 // pred_fallthru
          _
        %p280 = scmp.eq.s32.totalorder %s269, 1
        // Predicated region
        $region53: #{tpu_custom_call.1} parent=23 // pred_check
          %p281 = pneg %p280
        $region54: #{tpu_custom_call.1} parent=23 // pred_check_branch
          %283 = sbr.rel (%p281) target = $region56
        $region55: #{tpu_custom_call.1} parent=23 // pred_region
          %s284 = scalar_lea.vmem %s122, 16 [#allocation4]
          %v285 = vld [vmem:[%s284] sm:$0xff]
          %v286 = vld [vmem:[%s284 + $0x8] sm:$0xff]
          %287 = vrot.lane.b32.xlu0 %v285, 1
          %v288 = vpop.permute.xlu0 %287
          %289 = vrot.lane.b32.xlu0 %v286, 1
          %v290 = vpop.permute.xlu0 %289
          %vm291 = vcmp.lt.s32.totalorder %v144, 1
          %v292 = vsel %vm291, %v288, %v290
          %v293 = vsel %vm291, %v290, %v288
          %vm294 = vcmp.eq.s32.totalorder %v144, 0
          %vm295 = vcmp.eq.s32.totalorder %v145, 0
          %297 = vset.pattern.permute.xlu0 1
          %298 = vperm.xlu0 %297, %v285
          %v299 = vpop.permute.xlu0 %298
          %v301 = vsel %vm294, %v299, %v293
          %v302 = vsel %vm295, %v299, %v292
          %s303 = scalar_lea.vmem %s140, 16 [#allocation7]
          %304 = vst [vmem:[%s303] sm:$0xff] %v301
          %305 = vst [vmem:[%s303 + $0x8] sm:$0xff] %v302
        $region56: #{tpu_custom_call.1} parent=23 // pred_fallthru
          _
        %p306 = scmp.eq.s32.totalorder %s269, 4294967295
        // Predicated region
        $region57: #{tpu_custom_call.1} parent=23 // pred_check
          %p307 = pneg %p306
        $region58: #{tpu_custom_call.1} parent=23 // pred_check_branch
          %309 = sbr.rel (%p307) target = $region60
        $region59: #{tpu_custom_call.1} parent=23 // pred_region
          %s310 = scalar_lea.vmem %s122, 16 [#allocation4]
          %v311 = vld [vmem:[%s310] sm:$0xff]
          %v312 = vld [vmem:[%s310 + $0x8] sm:$0xff]
          %313 = vrot.lane.b32.xlu0 %v311, 127
          %v314 = vpop.permute.xlu0 %313
          %315 = vrot.lane.b32.xlu0 %v312, 127
          %v316 = vpop.permute.xlu0 %315
          %vm317 = vcmp.lt.s32.totalorder %v144, 127
          %v318 = vsel %vm317, %v314, %v316
          %v319 = vsel %vm317, %v316, %v314
          %vm320 = vcmp.eq.s32.totalorder %v144, 255
          %vm321 = vcmp.eq.s32.totalorder %v145, 255
          %323 = vset.pattern.permute.xlu0 126
          %324 = vperm.xlu0 %323, %v312
          %v325 = vpop.permute.xlu0 %324
          %v327 = vsel %vm320, %v325, %v318
          %v328 = vsel %vm321, %v325, %v319
          %s329 = scalar_lea.vmem %s140, 16 [#allocation7]
          %330 = vst [vmem:[%s329] sm:$0xff] %v327
          %331 = vst [vmem:[%s329 + $0x8] sm:$0xff] %v328
        $region60: #{tpu_custom_call.1} parent=23 // pred_fallthru
          _
        %p332 = scmp.eq.s32.totalorder %s269, 2
        // Predicated region
        $region61: #{tpu_custom_call.1} parent=23 // pred_check
          %p333 = pneg %p332
        $region62: #{tpu_custom_call.1} parent=23 // pred_check_branch
          %335 = sbr.rel (%p333) target = $region64
        $region63: #{tpu_custom_call.1} parent=23 // pred_region
          %s336 = scalar_lea.vmem %s122, 16 [#allocation4]
          %v337 = vld [vmem:[%s336] sm:$0xff]
          %v338 = vld [vmem:[%s336 + $0x8] sm:$0xff]
          %339 = vrot.lane.b32.xlu0 %v337, 2
          %v340 = vpop.permute.xlu0 %339
          %341 = vrot.lane.b32.xlu0 %v338, 2
          %v342 = vpop.permute.xlu0 %341
          %vm343 = vcmp.lt.s32.totalorder %v144, 2
          %v344 = vsel %vm343, %v340, %v342
          %v345 = vsel %vm343, %v342, %v340
          %vm346 = vcmp.eq.s32.totalorder %v144, 0
          %vm347 = vcmp.eq.s32.totalorder %v145, 0
          %349 = vset.pattern.permute.xlu0 2
          %350 = vperm.xlu0 %349, %v337
          %v351 = vpop.permute.xlu0 %350
          %v353 = vsel %vm346, %v351, %v345
          %v354 = vsel %vm347, %v351, %v344
          %vm355 = vcmp.eq.s32.totalorder %v144, 1
          %vm356 = vcmp.eq.s32.totalorder %v145, 1
          %357 = vset.pattern.permute.xlu0 1
          %358 = vperm.xlu0 %357, %v337
          %v359 = vpop.permute.xlu0 %358
          %v361 = vsel %vm355, %v359, %v353
          %v362 = vsel %vm356, %v359, %v354
          %s363 = scalar_lea.vmem %s140, 16 [#allocation7]
          %364 = vst [vmem:[%s363] sm:$0xff] %v361
          %365 = vst [vmem:[%s363 + $0x8] sm:$0xff] %v362
        $region64: #{tpu_custom_call.1} parent=23 // pred_fallthru
          _
        %p366 = scmp.eq.s32.totalorder %s269, 4294967294
        // Predicated region
        $region65: #{tpu_custom_call.1} parent=23 // pred_check
          %p367 = pneg %p366
        $region66: #{tpu_custom_call.1} parent=23 // pred_check_branch
          %369 = sbr.rel (%p367) target = $region68
        $region67: #{tpu_custom_call.1} parent=23 // pred_region
          %s370 = scalar_lea.vmem %s122, 16 [#allocation4]
          %v371 = vld [vmem:[%s370] sm:$0xff]
          %v372 = vld [vmem:[%s370 + $0x8] sm:$0xff]
          %373 = vrot.lane.b32.xlu0 %v371, 126
          %v374 = vpop.permute.xlu0 %373
          %375 = vrot.lane.b32.xlu0 %v372, 126
          %v376 = vpop.permute.xlu0 %375
          %vm377 = vcmp.lt.s32.totalorder %v144, 126
          %v378 = vsel %vm377, %v374, %v376
          %v379 = vsel %vm377, %v376, %v374
          %vm380 = vcmp.eq.s32.totalorder %v144, 254
          %vm381 = vcmp.eq.s32.totalorder %v145, 254
          %383 = vset.pattern.permute.xlu0 126
          %384 = vperm.xlu0 %383, %v372
          %v385 = vpop.permute.xlu0 %384
          %v387 = vsel %vm380, %v385, %v378
          %v388 = vsel %vm381, %v385, %v379
          %vm389 = vcmp.eq.s32.totalorder %v144, 255
          %vm390 = vcmp.eq.s32.totalorder %v145, 255
          %391 = vset.pattern.permute.xlu0 125
          %392 = vperm.xlu0 %391, %v372
          %v393 = vpop.permute.xlu0 %392
          %v395 = vsel %vm389, %v393, %v387
          %v396 = vsel %vm390, %v393, %v388
          %s397 = scalar_lea.vmem %s140, 16 [#allocation7]
          %398 = vst [vmem:[%s397] sm:$0xff] %v395
          %399 = vst [vmem:[%s397 + $0x8] sm:$0xff] %v396
        $region68: #{tpu_custom_call.1} parent=23 // pred_fallthru
          _
        %s400 = sadd.s32 %s146, 2
        %s401 = sld [smem:[#allocation3 + %s400]]
        %p402 = scmp.eq.s32.totalorder %s401, 0
        // Predicated region
        $region69: #{tpu_custom_call.1} parent=23 // pred_check
          %p403 = pneg %p402
        $region70: #{tpu_custom_call.1} parent=23 // pred_check_branch
          %405 = sbr.rel (%p403) target = $region72
        $region71: #{tpu_custom_call.1} parent=23 // pred_region
          %s406 = scalar_lea.vmem %s122, 32 [#allocation4]
          %v407 = vld [vmem:[%s406] sm:$0xff]
          %v408 = vld [vmem:[%s406 + $0x8] sm:$0xff]
          %s409 = scalar_lea.vmem %s140, 32 [#allocation7]
          %410 = vst [vmem:[%s409] sm:$0xff] %v407
          %411 = vst [vmem:[%s409 + $0x8] sm:$0xff] %v408
        $region72: #{tpu_custom_call.1} parent=23 // pred_fallthru
          _
        %p412 = scmp.eq.s32.totalorder %s401, 1
        // Predicated region
        $region73: #{tpu_custom_call.1} parent=23 // pred_check
          %p413 = pneg %p412
        $region74: #{tpu_custom_call.1} parent=23 // pred_check_branch
          %415 = sbr.rel (%p413) target = $region76
        $region75: #{tpu_custom_call.1} parent=23 // pred_region
          %s416 = scalar_lea.vmem %s122, 32 [#allocation4]
          %v417 = vld [vmem:[%s416] sm:$0xff]
          %v418 = vld [vmem:[%s416 + $0x8] sm:$0xff]
          %419 = vrot.lane.b32.xlu0 %v417, 1
          %v420 = vpop.permute.xlu0 %419
          %421 = vrot.lane.b32.xlu0 %v418, 1
          %v422 = vpop.permute.xlu0 %421
          %vm423 = vcmp.lt.s32.totalorder %v144, 1
          %v424 = vsel %vm423, %v420, %v422
          %v425 = vsel %vm423, %v422, %v420
          %vm426 = vcmp.eq.s32.totalorder %v144, 0
          %vm427 = vcmp.eq.s32.totalorder %v145, 0
          %429 = vset.pattern.permute.xlu0 1
          %430 = vperm.xlu0 %429, %v417
          %v431 = vpop.permute.xlu0 %430
          %v433 = vsel %vm426, %v431, %v425
          %v434 = vsel %vm427, %v431, %v424
          %s435 = scalar_lea.vmem %s140, 32 [#allocation7]
          %436 = vst [vmem:[%s435] sm:$0xff] %v433
          %437 = vst [vmem:[%s435 + $0x8] sm:$0xff] %v434
        $region76: #{tpu_custom_call.1} parent=23 // pred_fallthru
          _
        %p438 = scmp.eq.s32.totalorder %s401, 4294967295
        // Predicated region
        $region77: #{tpu_custom_call.1} parent=23 // pred_check
          %p439 = pneg %p438
        $region78: #{tpu_custom_call.1} parent=23 // pred_check_branch
          %441 = sbr.rel (%p439) target = $region80
        $region79: #{tpu_custom_call.1} parent=23 // pred_region
          %s442 = scalar_lea.vmem %s122, 32 [#allocation4]
          %v443 = vld [vmem:[%s442] sm:$0xff]
          %v444 = vld [vmem:[%s442 + $0x8] sm:$0xff]
          %445 = vrot.lane.b32.xlu0 %v443, 127
          %v446 = vpop.permute.xlu0 %445
          %447 = vrot.lane.b32.xlu0 %v444, 127
          %v448 = vpop.permute.xlu0 %447
          %vm449 = vcmp.lt.s32.totalorder %v144, 127
          %v450 = vsel %vm449, %v446, %v448
          %v451 = vsel %vm449, %v448, %v446
          %vm452 = vcmp.eq.s32.totalorder %v144, 255
          %vm453 = vcmp.eq.s32.totalorder %v145, 255
          %455 = vset.pattern.permute.xlu0 126
          %456 = vperm.xlu0 %455, %v444
          %v457 = vpop.permute.xlu0 %456
          %v459 = vsel %vm452, %v457, %v450
          %v460 = vsel %vm453, %v457, %v451
          %s461 = scalar_lea.vmem %s140, 32 [#allocation7]
          %462 = vst [vmem:[%s461] sm:$0xff] %v459
          %463 = vst [vmem:[%s461 + $0x8] sm:$0xff] %v460
        $region80: #{tpu_custom_call.1} parent=23 // pred_fallthru
          _
        %p464 = scmp.eq.s32.totalorder %s401, 2
        // Predicated region
        $region81: #{tpu_custom_call.1} parent=23 // pred_check
          %p465 = pneg %p464
        $region82: #{tpu_custom_call.1} parent=23 // pred_check_branch
          %467 = sbr.rel (%p465) target = $region84
        $region83: #{tpu_custom_call.1} parent=23 // pred_region
          %s468 = scalar_lea.vmem %s122, 32 [#allocation4]
          %v469 = vld [vmem:[%s468] sm:$0xff]
          %v470 = vld [vmem:[%s468 + $0x8] sm:$0xff]
          %471 = vrot.lane.b32.xlu0 %v469, 2
          %v472 = vpop.permute.xlu0 %471
          %473 = vrot.lane.b32.xlu0 %v470, 2
          %v474 = vpop.permute.xlu0 %473
          %vm475 = vcmp.lt.s32.totalorder %v144, 2
          %v476 = vsel %vm475, %v472, %v474
          %v477 = vsel %vm475, %v474, %v472
          %vm478 = vcmp.eq.s32.totalorder %v144, 0
          %vm479 = vcmp.eq.s32.totalorder %v145, 0
          %481 = vset.pattern.permute.xlu0 2
          %482 = vperm.xlu0 %481, %v469
          %v483 = vpop.permute.xlu0 %482
          %v485 = vsel %vm478, %v483, %v477
          %v486 = vsel %vm479, %v483, %v476
          %vm487 = vcmp.eq.s32.totalorder %v144, 1
          %vm488 = vcmp.eq.s32.totalorder %v145, 1
          %489 = vset.pattern.permute.xlu0 1
          %490 = vperm.xlu0 %489, %v469
          %v491 = vpop.permute.xlu0 %490
          %v493 = vsel %vm487, %v491, %v485
          %v494 = vsel %vm488, %v491, %v486
          %s495 = scalar_lea.vmem %s140, 32 [#allocation7]
          %496 = vst [vmem:[%s495] sm:$0xff] %v493
          %497 = vst [vmem:[%s495 + $0x8] sm:$0xff] %v494
        $region84: #{tpu_custom_call.1} parent=23 // pred_fallthru
          _
        %p498 = scmp.eq.s32.totalorder %s401, 4294967294
        // Predicated region
        $region85: #{tpu_custom_call.1} parent=23 // pred_check
          %p499 = pneg %p498
        $region86: #{tpu_custom_call.1} parent=23 // pred_check_branch
          %501 = sbr.rel (%p499) target = $region88
        $region87: #{tpu_custom_call.1} parent=23 // pred_region
          %s502 = scalar_lea.vmem %s122, 32 [#allocation4]
          %v503 = vld [vmem:[%s502] sm:$0xff]
          %v504 = vld [vmem:[%s502 + $0x8] sm:$0xff]
          %505 = vrot.lane.b32.xlu0 %v503, 126
          %v506 = vpop.permute.xlu0 %505
          %507 = vrot.lane.b32.xlu0 %v504, 126
          %v508 = vpop.permute.xlu0 %507
          %vm509 = vcmp.lt.s32.totalorder %v144, 126
          %v510 = vsel %vm509, %v506, %v508
          %v511 = vsel %vm509, %v508, %v506
          %vm512 = vcmp.eq.s32.totalorder %v144, 254
          %vm513 = vcmp.eq.s32.totalorder %v145, 254
          %515 = vset.pattern.permute.xlu0 126
          %516 = vperm.xlu0 %515, %v504
          %v517 = vpop.permute.xlu0 %516
          %v519 = vsel %vm512, %v517, %v510
          %v520 = vsel %vm513, %v517, %v511
          %vm521 = vcmp.eq.s32.totalorder %v144, 255
          %vm522 = vcmp.eq.s32.totalorder %v145, 255
          %523 = vset.pattern.permute.xlu0 125
          %524 = vperm.xlu0 %523, %v504
          %v525 = vpop.permute.xlu0 %524
          %v527 = vsel %vm521, %v525, %v519
          %v528 = vsel %vm522, %v525, %v520
          %s529 = scalar_lea.vmem %s140, 32 [#allocation7]
          %530 = vst [vmem:[%s529] sm:$0xff] %v527
          %531 = vst [vmem:[%s529 + $0x8] sm:$0xff] %v528
        $region88: #{tpu_custom_call.1} parent=23 // pred_fallthru
          _
        %s532 = sadd.s32 %s146, 3
        %s533 = sld [smem:[#allocation3 + %s532]]
        %p534 = scmp.eq.s32.totalorder %s533, 0
        // Predicated region
        $region89: #{tpu_custom_call.1} parent=23 // pred_check
          %p535 = pneg %p534
        $region90: #{tpu_custom_call.1} parent=23 // pred_check_branch
          %537 = sbr.rel (%p535) target = $region92
        $region91: #{tpu_custom_call.1} parent=23 // pred_region
          %s538 = scalar_lea.vmem %s122, 48 [#allocation4]
          %v539 = vld [vmem:[%s538] sm:$0xff]
          %v540 = vld [vmem:[%s538 + $0x8] sm:$0xff]
          %s541 = scalar_lea.vmem %s140, 48 [#allocation7]
          %542 = vst [vmem:[%s541] sm:$0xff] %v539
          %543 = vst [vmem:[%s541 + $0x8] sm:$0xff] %v540
        $region92: #{tpu_custom_call.1} parent=23 // pred_fallthru
          _
        %p544 = scmp.eq.s32.totalorder %s533, 1
        // Predicated region
        $region93: #{tpu_custom_call.1} parent=23 // pred_check
          %p545 = pneg %p544
        $region94: #{tpu_custom_call.1} parent=23 // pred_check_branch
          %547 = sbr.rel (%p545) target = $region96
        $region95: #{tpu_custom_call.1} parent=23 // pred_region
          %s548 = scalar_lea.vmem %s122, 48 [#allocation4]
          %v549 = vld [vmem:[%s548] sm:$0xff]
          %v550 = vld [vmem:[%s548 + $0x8] sm:$0xff]
          %551 = vrot.lane.b32.xlu0 %v549, 1
          %v552 = vpop.permute.xlu0 %551
          %553 = vrot.lane.b32.xlu0 %v550, 1
          %v554 = vpop.permute.xlu0 %553
          %vm555 = vcmp.lt.s32.totalorder %v144, 1
          %v556 = vsel %vm555, %v552, %v554
          %v557 = vsel %vm555, %v554, %v552
          %vm558 = vcmp.eq.s32.totalorder %v144, 0
          %vm559 = vcmp.eq.s32.totalorder %v145, 0
          %561 = vset.pattern.permute.xlu0 1
          %562 = vperm.xlu0 %561, %v549
          %v563 = vpop.permute.xlu0 %562
          %v565 = vsel %vm558, %v563, %v557
          %v566 = vsel %vm559, %v563, %v556
          %s567 = scalar_lea.vmem %s140, 48 [#allocation7]
          %568 = vst [vmem:[%s567] sm:$0xff] %v565
          %569 = vst [vmem:[%s567 + $0x8] sm:$0xff] %v566
        $region96: #{tpu_custom_call.1} parent=23 // pred_fallthru
          _
        %p570 = scmp.eq.s32.totalorder %s533, 4294967295
        // Predicated region
        $region97: #{tpu_custom_call.1} parent=23 // pred_check
          %p571 = pneg %p570
        $region98: #{tpu_custom_call.1} parent=23 // pred_check_branch
          %573 = sbr.rel (%p571) target = $region100
        $region99: #{tpu_custom_call.1} parent=23 // pred_region
          %s574 = scalar_lea.vmem %s122, 48 [#allocation4]
          %v575 = vld [vmem:[%s574] sm:$0xff]
          %v576 = vld [vmem:[%s574 + $0x8] sm:$0xff]
          %577 = vrot.lane.b32.xlu0 %v575, 127
          %v578 = vpop.permute.xlu0 %577
          %579 = vrot.lane.b32.xlu0 %v576, 127
          %v580 = vpop.permute.xlu0 %579
          %vm581 = vcmp.lt.s32.totalorder %v144, 127
          %v582 = vsel %vm581, %v578, %v580
          %v583 = vsel %vm581, %v580, %v578
          %vm584 = vcmp.eq.s32.totalorder %v144, 255
          %vm585 = vcmp.eq.s32.totalorder %v145, 255
          %587 = vset.pattern.permute.xlu0 126
          %588 = vperm.xlu0 %587, %v576
          %v589 = vpop.permute.xlu0 %588
          %v591 = vsel %vm584, %v589, %v582
          %v592 = vsel %vm585, %v589, %v583
          %s593 = scalar_lea.vmem %s140, 48 [#allocation7]
          %594 = vst [vmem:[%s593] sm:$0xff] %v591
          %595 = vst [vmem:[%s593 + $0x8] sm:$0xff] %v592
        $region100: #{tpu_custom_call.1} parent=23 // pred_fallthru
          _
        %p596 = scmp.eq.s32.totalorder %s533, 2
        // Predicated region
        $region101: #{tpu_custom_call.1} parent=23 // pred_check
          %p597 = pneg %p596
        $region102: #{tpu_custom_call.1} parent=23 // pred_check_branch
          %599 = sbr.rel (%p597) target = $region104
        $region103: #{tpu_custom_call.1} parent=23 // pred_region
          %s600 = scalar_lea.vmem %s122, 48 [#allocation4]
          %v601 = vld [vmem:[%s600] sm:$0xff]
          %v602 = vld [vmem:[%s600 + $0x8] sm:$0xff]
          %603 = vrot.lane.b32.xlu0 %v601, 2
          %v604 = vpop.permute.xlu0 %603
          %605 = vrot.lane.b32.xlu0 %v602, 2
          %v606 = vpop.permute.xlu0 %605
          %vm607 = vcmp.lt.s32.totalorder %v144, 2
          %v608 = vsel %vm607, %v604, %v606
          %v609 = vsel %vm607, %v606, %v604
          %vm610 = vcmp.eq.s32.totalorder %v144, 0
          %vm611 = vcmp.eq.s32.totalorder %v145, 0
          %613 = vset.pattern.permute.xlu0 2
          %614 = vperm.xlu0 %613, %v601
          %v615 = vpop.permute.xlu0 %614
          %v617 = vsel %vm610, %v615, %v609
          %v618 = vsel %vm611, %v615, %v608
          %vm619 = vcmp.eq.s32.totalorder %v144, 1
          %vm620 = vcmp.eq.s32.totalorder %v145, 1
          %621 = vset.pattern.permute.xlu0 1
          %622 = vperm.xlu0 %621, %v601
          %v623 = vpop.permute.xlu0 %622
          %v625 = vsel %vm619, %v623, %v617
          %v626 = vsel %vm620, %v623, %v618
          %s627 = scalar_lea.vmem %s140, 48 [#allocation7]
          %628 = vst [vmem:[%s627] sm:$0xff] %v625
          %629 = vst [vmem:[%s627 + $0x8] sm:$0xff] %v626
        $region104: #{tpu_custom_call.1} parent=23 // pred_fallthru
          _
        %p630 = scmp.eq.s32.totalorder %s533, 4294967294
        // Predicated region
        $region105: #{tpu_custom_call.1} parent=23 // pred_check
          %p631 = pneg %p630
        $region106: #{tpu_custom_call.1} parent=23 // pred_check_branch
          %633 = sbr.rel (%p631) target = $region108
        $region107: #{tpu_custom_call.1} parent=23 // pred_region
          %s634 = scalar_lea.vmem %s122, 48 [#allocation4]
          %v635 = vld [vmem:[%s634] sm:$0xff]
          %v636 = vld [vmem:[%s634 + $0x8] sm:$0xff]
          %637 = vrot.lane.b32.xlu0 %v635, 126
          %v638 = vpop.permute.xlu0 %637
          %639 = vrot.lane.b32.xlu0 %v636, 126
          %v640 = vpop.permute.xlu0 %639
          %vm641 = vcmp.lt.s32.totalorder %v144, 126
          %v642 = vsel %vm641, %v638, %v640
          %v643 = vsel %vm641, %v640, %v638
          %vm644 = vcmp.eq.s32.totalorder %v144, 254
          %vm645 = vcmp.eq.s32.totalorder %v145, 254
          %647 = vset.pattern.permute.xlu0 126
          %648 = vperm.xlu0 %647, %v636
          %v649 = vpop.permute.xlu0 %648
          %v651 = vsel %vm644, %v649, %v642
          %v652 = vsel %vm645, %v649, %v643
          %vm653 = vcmp.eq.s32.totalorder %v144, 255
          %vm654 = vcmp.eq.s32.totalorder %v145, 255
          %655 = vset.pattern.permute.xlu0 125
          %656 = vperm.xlu0 %655, %v636
          %v657 = vpop.permute.xlu0 %656
          %v659 = vsel %vm653, %v657, %v651
          %v660 = vsel %vm654, %v657, %v652
          %s661 = scalar_lea.vmem %s140, 48 [#allocation7]
          %662 = vst [vmem:[%s661] sm:$0xff] %v659
          %663 = vst [vmem:[%s661 + $0x8] sm:$0xff] %v660
        $region108: #{tpu_custom_call.1} parent=23 // pred_fallthru
          _
        %s664 = sand.u32 %s57, 1
        %s665 = scalar_lea.sflag [#allocation6], %s664
        %s666 = sand.u32 %s57, 1
        %s667 = smul.addr %s666, 64
        %s668 = scalar_lea.vmem [#allocation7], %s667
        // Predicated region
        $region109: #{tpu_custom_call.1} parent=23 // pred_check
          %p669 = pneg %p67
        $region110: #{tpu_custom_call.1} parent=23 // pred_check_branch
          %671 = sbr.rel (%p669) target = $region112
        $region111: #{tpu_custom_call.1} parent=23 // pred_region
          %s672 = smul.u32 4, %s23
          %s674 = ssub.s32 1024, 1024
          %675 = vsyncadd %s665, %s674
          %s676 = smul.addr %s672, 2
          %s677 = smul.addr %s676, 128
          %s678 = scalar_lea.hbm %s2, %s677
          %s679 = sshll.u32 %s668, 4
          %s680 = int_to_ptr.vmem [resolvable:$true] %s679
          %685 = dma.vmem_to_hbm [thread:$0]  %s680, 1024, %s678, %s665, 256, 256, 16
        $region112: #{tpu_custom_call.1} parent=23 // pred_fallthru
          _
      $region24: #{tpu_custom_call.1} parent=5 // pred_fallthru
        _
      %p686 = scmp.le.s32.totalorder 2, %s18
      // Predicated region
      $region113: #{tpu_custom_call.1} parent=5 // pred_check
        %p687 = pneg %p686
      $region114: #{tpu_custom_call.1} parent=5 // pred_check_branch
        %689 = sbr.rel (%p687) target = $region116
      $region115: #{tpu_custom_call.1} parent=5 // pred_region
        %s690 = ssub.s32 %s18, 2
        // Predicated region
        $region117: #{tpu_custom_call.1} parent=115 // pred_check
          %p691 = pneg %p73
        $region118: #{tpu_custom_call.1} parent=115 // pred_check_branch
          %693 = sbr.rel (%p691) target = $region120
        $region119: #{tpu_custom_call.1} parent=115 // pred_region
          %s694 = sand.u32 %s58, 1
          %s695 = scalar_lea.sflag [#allocation6], %s694
          %s696 = sand.u32 %s58, 1
          %s697 = smul.addr %s696, 64
          %s698 = scalar_lea.vmem [#allocation7], %s697
          %699 = dma.done %s695, 1024
        $region120: #{tpu_custom_call.1} parent=115 // pred_fallthru
          _
      $region116: #{tpu_custom_call.1} parent=5 // pred_fallthru
        _
    $region6: #{tpu_custom_call.1} parent=1 // loop_footer
      %s22 = sadd.s32 1, %s18
    $region7: #{tpu_custom_call.1} parent=1 // loop_footer_branch
      %17 = sbr.rel target = $region3
    $region8: #{tpu_custom_call.1} parent=1 // loop_exit
      _
    %700 = vsyncpa [#allocation5], 1
    %s701 = scalar_lea.sflag [#allocation5], 1
    %702 = vsyncpa %s701, 1
    %703 = vsyncpa [#allocation6], 1
    %s704 = scalar_lea.sflag [#allocation6], 1
    %705 = vsyncpa %s704, 1

</llo_original>
